<compile_context>
chip_gen: v7x
topology: tpu7x:2x2x1
jax: 0.10.0
libtpu: 0.0.40
codegen_flags: <defaults>
</compile_context>

<pallas_src>
import functools

import jax
import jax.numpy as jnp
from jax.experimental import pallas as pl
from jax.experimental.pallas import tpu as pltpu

_LANE = 128   # lane width: last-dim multiples of 128 -> unmasked stores
_SUB = 16     # bf16 sublane packing: keep batch tiles multiples of 16


def _round_up(n, m):
    return ((n + m - 1) // m) * m


def _textnet_kernel(x_ref, w1_ref, b1_ref, w2_ref, b2_ref,
                    wh_ref, bh_ref, wl_ref, bl_ref,
                    code_ref, lab_ref):
    # Layer 1: bf16 MXU matmul, f32 accumulation, f32 bias-add + ReLU.
    # (nn.Dropout -> identity: eval-mode forward semantics.)
    h = jnp.dot(x_ref[...], w1_ref[...], preferred_element_type=jnp.float32)
    h = jnp.maximum(h + b1_ref[...], 0.0)

    # Layer 2: Linear + ReLU (Dropout -> identity).
    h = jnp.dot(h.astype(jnp.bfloat16), w2_ref[...],
                preferred_element_type=jnp.float32)
    h = jnp.maximum(h + b2_ref[...], 0.0)

    # hashlayer (lane-padded to 128 columns; padded columns are exactly zero).
    code = jnp.dot(h.astype(jnp.bfloat16), wh_ref[...],
                   preferred_element_type=jnp.float32) + bh_ref[...]
    # labelayer consumes the hash code, as in the PyTorch forward.
    lab = jnp.dot(code.astype(jnp.bfloat16), wl_ref[...],
                  preferred_element_type=jnp.float32) + bl_ref[...]

    code_ref[...] = code.astype(code_ref.dtype)
    lab_ref[...] = lab.astype(lab_ref.dtype)


@functools.partial(jax.jit, static_argnames=("block_b",))
def textnet_forward(x, w1, b1, w2, b2, wh, bh, wl, bl, *, block_b=512):
    """Fused TextNet forward. Returns (x_code, x_lab).

    x:  (B, input_dim) f32
    w*: (in_features, out_features) f32, b*: (out_features,) f32
    """
    B, D_in = x.shape
    H = w1.shape[1]
    D_out = wh.shape[1]
    C = wl.shape[1]
    out_dtype = x.dtype

    # ---- lane-dense padding of the small output layers (sliced off below) ----
    D_out_p = _round_up(D_out, _LANE)
    C_p = _round_up(C, _LANE)

    # Weights -> bf16 (MXU native); biases stay f32, reshaped to (1, N) so
    # every ref is a clean (sublane, lane) tile.  Zero padding keeps the
    # padded output columns exactly zero, so slicing restores exact semantics.
    w1_b = w1.astype(jnp.bfloat16)
    w2_b = w2.astype(jnp.bfloat16)
    wh_b = jnp.pad(wh, ((0, 0), (0, D_out_p - D_out))).astype(jnp.bfloat16)
    wl_b = jnp.pad(wl, ((0, D_out_p - D_out), (0, C_p - C))).astype(jnp.bfloat16)
    b1_2d = b1.reshape(1, H).astype(jnp.float32)
    b2_2d = b2.reshape(1, H).astype(jnp.float32)
    bh_2d = jnp.pad(bh, (0, D_out_p - D_out)).reshape(1, D_out_p).astype(jnp.float32)
    bl_2d = jnp.pad(bl, (0, C_p - C)).reshape(1, C_p).astype(jnp.float32)

    # ---- batch padding / tiling ----
    B_pad = _round_up(B, _SUB)
    if B_pad <= _SUB:
        tb = B_pad  # tiny batch: one clean tile
    else:
        # At least 2 tiles so the "parallel" axis shards across both
        # TensorCores on v7x; cap at block_b to bound per-step VMEM.
        tb = min(block_b, _round_up(pl.cdiv(B_pad, 2), _SUB))
    grid = (pl.cdiv(B_pad, tb),)

    x_p = jnp.pad(x, ((0, B_pad - B), (0, 0))).astype(jnp.bfloat16)

    # Explicit VMEM budget: double-buffered x/outputs + resident bf16 weights
    # (double-buffered by the default pipeline) + f32 intermediates + margin.
    est = (
        2 * tb * D_in * 2                                              # x (bf16), 2 bufs
        + 2 * 2 * (D_in * H + H * H + H * D_out_p + D_out_p * C_p)    # weights (bf16), 2 bufs
        + 2 * 4 * (2 * H + D_out_p + C_p)                              # biases (f32), 2 bufs
        + 2 * tb * (D_out_p + C_p) * 4                                 # outputs (f32), 2 bufs
        + 2 * tb * H * 4                                               # f32 intermediates
    )
    vmem_limit = min(max(int(est * 2) + (8 << 20), 32 << 20), 48 << 20)

    def _const(i):
        return (0, 0)

    in_specs = [
        pl.BlockSpec((tb, D_in), lambda i: (i, 0)),     # x (bf16), batch-tiled
        pl.BlockSpec((D_in, H), _const),                # W1 (bf16), VMEM-resident
        pl.BlockSpec((1, H), _const),                   # b1
        pl.BlockSpec((H, H), _const),                   # W2
        pl.BlockSpec((1, H), _const),                   # b2
        pl.BlockSpec((H, D_out_p), _const),             # Wh (lane-padded)
        pl.BlockSpec((1, D_out_p), _const),             # bh
        pl.BlockSpec((D_out_p, C_p), _const),           # Wl (lane-padded)
        pl.BlockSpec((1, C_p), _const),                 # bl
    ]
    out_specs = (
        pl.BlockSpec((tb, D_out_p), lambda i: (i, 0)),  # x_code (padded)
        pl.BlockSpec((tb, C_p), lambda i: (i, 0)),      # x_lab  (padded)
    )
    out_shape = (
        jax.ShapeDtypeStruct((B_pad, D_out_p), out_dtype),
        jax.ShapeDtypeStruct((B_pad, C_p), out_dtype),
    )

    code_p, lab_p = pl.pallas_call(
        _textnet_kernel,
        out_shape=out_shape,
        grid=grid,
        in_specs=in_specs,
        out_specs=out_specs,
        compiler_params=pltpu.CompilerParams(
            dimension_semantics=("parallel",),  # megacore sharding on v7x
            vmem_limit_bytes=vmem_limit,
        ),
    )(x_p, w1_b, b1_2d, w2_b, b2_2d, wh_b, bh_2d, wl_b, bl_2d)

    # Strip batch + lane padding.
    return code_p[:B, :D_out], lab_p[:B, :C]


def _reference_forward(x, w1, b1, w2, b2, wh, bh, wl, bl):
    h = jnp.maximum(x @ w1 + b1, 0.0)
    h = jnp.maximum(h @ w2 + b2, 0.0)
    code = h @ wh + bh
    lab = code @ wl + bl
    return code, lab


if __name__ == "__main__":
    # Small shapes consistent with the module: batch=2, input_dim=32,
    # hid=feature=512 (fixed by TextNet), output_dim=64, n_class=16.
    B, D_IN, HID, D_OUT, N_CLASS = 2, 32, 512, 64, 16

    key = jax.random.PRNGKey(0)
    keys = jax.random.split(key, 9)
    scale = 0.05
    x = jax.random.normal(keys[0], (B, D_IN), dtype=jnp.float32)
    w1 = scale * jax.random.normal(keys[1], (D_IN, HID), dtype=jnp.float32)
    b1 = scale * jax.random.normal(keys[2], (HID,), dtype=jnp.float32)
    w2 = scale * jax.random.normal(keys[3], (HID, HID), dtype=jnp.float32)
    b2 = scale * jax.random.normal(keys[4], (HID,), dtype=jnp.float32)
    wh = scale * jax.random.normal(keys[5], (HID, D_OUT), dtype=jnp.float32)
    bh = scale * jax.random.normal(keys[6], (D_OUT,), dtype=jnp.float32)
    wl = scale * jax.random.normal(keys[7], (D_OUT, N_CLASS), dtype=jnp.float32)
    bl = scale * jax.random.normal(keys[8], (N_CLASS,), dtype=jnp.float32)

    x_code, x_lab = textnet_forward(x, w1, b1, w2, b2, wh, bh, wl, bl)
    jax.block_until_ready((x_code, x_lab))

    ref_code, ref_lab = _reference_forward(x, w1, b1, w2, b2, wh, bh, wl, bl)

    assert x_code.shape == (B, D_OUT) and x_lab.shape == (B, N_CLASS)
    # bf16 matmuls (f32 accumulation) -> relaxed tolerance vs the f32 reference.
    assert jnp.allclose(x_code, ref_code, rtol=3e-2, atol=3e-2)
    assert jnp.allclose(x_lab, ref_lab, rtol=3e-2, atol=3e-2)

    print("KERNEL_OK")
</pallas_src>

<mosaic_0001>
module attributes {stable_mosaic.version = 11 : i64} {
  func.func @_textnet_kernel(%arg0: i32, %arg1: memref<16x32xbf16, #tpu.memory_space<vmem>>, %arg2: memref<32x512xbf16, #tpu.memory_space<vmem>>, %arg3: memref<1x512xf32, #tpu.memory_space<vmem>>, %arg4: memref<512x512xbf16, #tpu.memory_space<vmem>>, %arg5: memref<1x512xf32, #tpu.memory_space<vmem>>, %arg6: memref<512x128xbf16, #tpu.memory_space<vmem>>, %arg7: memref<1x128xf32, #tpu.memory_space<vmem>>, %arg8: memref<128x128xbf16, #tpu.memory_space<vmem>>, %arg9: memref<1x128xf32, #tpu.memory_space<vmem>>, %arg10: memref<16x128xf32, #tpu.memory_space<vmem>>, %arg11: memref<16x128xf32, #tpu.memory_space<vmem>>) attributes {dimension_semantics = [#tpu.dimension_semantics<parallel>], iteration_bounds = array<i64: 1>, scalar_prefetch = 0 : i64, scratch_operands = 0 : i64, tpu.core_type = #tpu.core_type<tc>, window_params = [{transform_indices = @transform_0, window_bounds = array<i64: 16, 32>}, {pipeline_mode = #tpu.pipeline_mode<synchronous>, transform_indices = @transform_1, window_bounds = array<i64: 32, 512>}, {pipeline_mode = #tpu.pipeline_mode<synchronous>, transform_indices = @transform_2, window_bounds = array<i64: 1, 512>}, {pipeline_mode = #tpu.pipeline_mode<synchronous>, transform_indices = @transform_3, window_bounds = array<i64: 512, 512>}, {pipeline_mode = #tpu.pipeline_mode<synchronous>, transform_indices = @transform_4, window_bounds = array<i64: 1, 512>}, {pipeline_mode = #tpu.pipeline_mode<synchronous>, transform_indices = @transform_5, window_bounds = array<i64: 512, 128>}, {pipeline_mode = #tpu.pipeline_mode<synchronous>, transform_indices = @transform_6, window_bounds = array<i64: 1, 128>}, {pipeline_mode = #tpu.pipeline_mode<synchronous>, transform_indices = @transform_7, window_bounds = array<i64: 128, 128>}, {pipeline_mode = #tpu.pipeline_mode<synchronous>, transform_indices = @transform_8, window_bounds = array<i64: 1, 128>}, {transform_indices = @transform_9, window_bounds = array<i64: 16, 128>}, {transform_indices = @transform_10, window_bounds = array<i64: 16, 128>}]} {
    %c0 = arith.constant 0 : index
    %c0_0 = arith.constant 0 : index
    %0 = vector.load %arg1[%c0, %c0_0] : memref<16x32xbf16, #tpu.memory_space<vmem>>, vector<16x32xbf16>
    %c0_1 = arith.constant 0 : index
    %c0_2 = arith.constant 0 : index
    %1 = vector.load %arg2[%c0_1, %c0_2] : memref<32x512xbf16, #tpu.memory_space<vmem>>, vector<32x512xbf16>
    %cst = arith.constant dense<0.000000e+00> : vector<16x512xf32>
    %2 = tpu.matmul %0, %1, %cst {dimension_numbers = #tpu.dot_dimension_numbers<[1], [0], [0], [1], [0, 0, 1, 1], [], []>} : vector<16x32xbf16>, vector<32x512xbf16>, vector<16x512xf32> -> vector<16x512xf32>
    %c0_3 = arith.constant 0 : index
    %c0_4 = arith.constant 0 : index
    %3 = vector.load %arg3[%c0_3, %c0_4] : memref<1x512xf32, #tpu.memory_space<vmem>>, vector<1x512xf32>
    %4 = vector.broadcast %3 : vector<1x512xf32> to vector<16x512xf32>
    %5 = arith.addf %2, %4 : vector<16x512xf32>
    %cst_5 = arith.constant 0.000000e+00 : f32
    %6 = vector.broadcast %cst_5 : f32 to vector<16x512xf32>
    %7 = arith.maximumf %5, %6 : vector<16x512xf32>
    %8 = arith.truncf %7 : vector<16x512xf32> to vector<16x512xbf16>
    %c0_6 = arith.constant 0 : index
    %c0_7 = arith.constant 0 : index
    %9 = vector.load %arg4[%c0_6, %c0_7] : memref<512x512xbf16, #tpu.memory_space<vmem>>, vector<512x512xbf16>
    %cst_8 = arith.constant dense<0.000000e+00> : vector<16x512xf32>
    %10 = tpu.matmul %8, %9, %cst_8 {dimension_numbers = #tpu.dot_dimension_numbers<[1], [0], [0], [1], [0, 0, 1, 1], [], []>} : vector<16x512xbf16>, vector<512x512xbf16>, vector<16x512xf32> -> vector<16x512xf32>
    %c0_9 = arith.constant 0 : index
    %c0_10 = arith.constant 0 : index
    %11 = vector.load %arg5[%c0_9, %c0_10] : memref<1x512xf32, #tpu.memory_space<vmem>>, vector<1x512xf32>
    %12 = vector.broadcast %11 : vector<1x512xf32> to vector<16x512xf32>
    %13 = arith.addf %10, %12 : vector<16x512xf32>
    %cst_11 = arith.constant 0.000000e+00 : f32
    %14 = vector.broadcast %cst_11 : f32 to vector<16x512xf32>
    %15 = arith.maximumf %13, %14 : vector<16x512xf32>
    %16 = arith.truncf %15 : vector<16x512xf32> to vector<16x512xbf16>
    %c0_12 = arith.constant 0 : index
    %c0_13 = arith.constant 0 : index
    %17 = vector.load %arg6[%c0_12, %c0_13] : memref<512x128xbf16, #tpu.memory_space<vmem>>, vector<512x128xbf16>
    %cst_14 = arith.constant dense<0.000000e+00> : vector<16x128xf32>
    %18 = tpu.matmul %16, %17, %cst_14 {dimension_numbers = #tpu.dot_dimension_numbers<[1], [0], [0], [1], [0, 0, 1, 1], [], []>} : vector<16x512xbf16>, vector<512x128xbf16>, vector<16x128xf32> -> vector<16x128xf32>
    %c0_15 = arith.constant 0 : index
    %c0_16 = arith.constant 0 : index
    %19 = vector.load %arg7[%c0_15, %c0_16] : memref<1x128xf32, #tpu.memory_space<vmem>>, vector<1x128xf32>
    %20 = vector.broadcast %19 : vector<1x128xf32> to vector<16x128xf32>
    %21 = arith.addf %18, %20 : vector<16x128xf32>
    %22 = arith.truncf %21 : vector<16x128xf32> to vector<16x128xbf16>
    %c0_17 = arith.constant 0 : index
    %c0_18 = arith.constant 0 : index
    %23 = vector.load %arg8[%c0_17, %c0_18] : memref<128x128xbf16, #tpu.memory_space<vmem>>, vector<128x128xbf16>
    %cst_19 = arith.constant dense<0.000000e+00> : vector<16x128xf32>
    %24 = tpu.matmul %22, %23, %cst_19 {dimension_numbers = #tpu.dot_dimension_numbers<[1], [0], [0], [1], [0, 0, 1, 1], [], []>} : vector<16x128xbf16>, vector<128x128xbf16>, vector<16x128xf32> -> vector<16x128xf32>
    %c0_20 = arith.constant 0 : index
    %c0_21 = arith.constant 0 : index
    %25 = vector.load %arg9[%c0_20, %c0_21] : memref<1x128xf32, #tpu.memory_space<vmem>>, vector<1x128xf32>
    %26 = vector.broadcast %25 : vector<1x128xf32> to vector<16x128xf32>
    %27 = arith.addf %24, %26 : vector<16x128xf32>
    %c0_22 = arith.constant 0 : index
    %c0_23 = arith.constant 0 : index
    %28 = vector.load %arg10[%c0_22, %c0_23] : memref<16x128xf32, #tpu.memory_space<vmem>>, vector<16x128xf32>
    tpu.vector_store %arg10[%c0_22, %c0_23], %21 {strides = array<i32>} : memref<16x128xf32, #tpu.memory_space<vmem>>, vector<16x128xf32>,
    %c0_24 = arith.constant 0 : index
    %c0_25 = arith.constant 0 : index
    %29 = vector.load %arg11[%c0_24, %c0_25] : memref<16x128xf32, #tpu.memory_space<vmem>>, vector<16x128xf32>
    tpu.vector_store %arg11[%c0_24, %c0_25], %27 {strides = array<i32>} : memref<16x128xf32, #tpu.memory_space<vmem>>, vector<16x128xf32>,
    return
  }
  func.func @transform_0(%arg0: i32) -> (i32, i32) {
    %c0_i32 = arith.constant 0 : i32
    %c0_i32_0 = arith.constant 0 : i32
    return %arg0, %c0_i32 : i32, i32
  }
  func.func @transform_1(%arg0: i32) -> (i32, i32) {
    %c0_i32 = arith.constant 0 : i32
    %c0_i32_0 = arith.constant 0 : i32
    %c0_i32_1 = arith.constant 0 : i32
    return %c0_i32, %c0_i32_0 : i32, i32
  }
  func.func @transform_2(%arg0: i32) -> (i32, i32) {
    %c0_i32 = arith.constant 0 : i32
    %c0_i32_0 = arith.constant 0 : i32
    %c0_i32_1 = arith.constant 0 : i32
    return %c0_i32, %c0_i32_0 : i32, i32
  }
  func.func @transform_3(%arg0: i32) -> (i32, i32) {
    %c0_i32 = arith.constant 0 : i32
    %c0_i32_0 = arith.constant 0 : i32
    %c0_i32_1 = arith.constant 0 : i32
    return %c0_i32, %c0_i32_0 : i32, i32
  }
  func.func @transform_4(%arg0: i32) -> (i32, i32) {
    %c0_i32 = arith.constant 0 : i32
    %c0_i32_0 = arith.constant 0 : i32
    %c0_i32_1 = arith.constant 0 : i32
    return %c0_i32, %c0_i32_0 : i32, i32
  }
  func.func @transform_5(%arg0: i32) -> (i32, i32) {
    %c0_i32 = arith.constant 0 : i32
    %c0_i32_0 = arith.constant 0 : i32
    %c0_i32_1 = arith.constant 0 : i32
    return %c0_i32, %c0_i32_0 : i32, i32
  }
  func.func @transform_6(%arg0: i32) -> (i32, i32) {
    %c0_i32 = arith.constant 0 : i32
    %c0_i32_0 = arith.constant 0 : i32
    %c0_i32_1 = arith.constant 0 : i32
    return %c0_i32, %c0_i32_0 : i32, i32
  }
  func.func @transform_7(%arg0: i32) -> (i32, i32) {
    %c0_i32 = arith.constant 0 : i32
    %c0_i32_0 = arith.constant 0 : i32
    %c0_i32_1 = arith.constant 0 : i32
    return %c0_i32, %c0_i32_0 : i32, i32
  }
  func.func @transform_8(%arg0: i32) -> (i32, i32) {
    %c0_i32 = arith.constant 0 : i32
    %c0_i32_0 = arith.constant 0 : i32
    %c0_i32_1 = arith.constant 0 : i32
    return %c0_i32, %c0_i32_0 : i32, i32
  }
  func.func @transform_9(%arg0: i32) -> (i32, i32) {
    %c0_i32 = arith.constant 0 : i32
    %c0_i32_0 = arith.constant 0 : i32
    return %arg0, %c0_i32 : i32, i32
  }
  func.func @transform_10(%arg0: i32) -> (i32, i32) {
    %c0_i32 = arith.constant 0 : i32
    %c0_i32_0 = arith.constant 0 : i32
    return %arg0, %c0_i32 : i32, i32
  }
}

</mosaic_0001>

<llo_original>
// kernel: textnet_forward.1
$region0: #{textnet_forward.1}
  #allocation0 [shape = 'u32[]', space=smem, size = 0x4, offset = 0x4, fixed_abs, tag = 'smem constant byte address 0x4 - core index']
  #allocation1 [shape = 'u32[144,128]{1,0:T(1,128)}', space=vmem, size = 0x12000, scoped, tag = 'internal scratch']
  %s0 = inlined_call_operand.vmem [shape: bf16[16,32], index: 0, kind: input, shape index: {}]
  %s1 = inlined_call_operand.vmem [shape: bf16[32,512], index: 1, kind: input, shape index: {}]
  %s2 = inlined_call_operand.vmem [shape: f32[1,512], index: 2, kind: input, shape index: {}]
  %s3 = inlined_call_operand.vmem [shape: bf16[512,512], index: 3, kind: input, shape index: {}]
  %s4 = inlined_call_operand.vmem [shape: f32[1,512], index: 4, kind: input, shape index: {}]
  %s5 = inlined_call_operand.vmem [shape: bf16[512,128], index: 5, kind: input, shape index: {}]
  %s6 = inlined_call_operand.vmem [shape: f32[1,128], index: 6, kind: input, shape index: {}]
  %s7 = inlined_call_operand.vmem [shape: bf16[128,128], index: 7, kind: input, shape index: {}]
  %s8 = inlined_call_operand.vmem [shape: f32[1,128], index: 8, kind: input, shape index: {}]
  %s9 = inlined_call_operand.vmem [shape: f32[16,128], index: 9, kind: output, shape index: {0}]
  %s10 = inlined_call_operand.vmem [shape: f32[16,128], index: 10, kind: output, shape index: {1}]
  %11 = xla_tuple %s9, %s10
  %s12 = sld [smem:[#allocation0]]
  $region54: #{textnet_forward.1} parent=0
    _
  %s14 = ssub.s32 1, %s12
  %s15 = scalar_select 0, %s14, %s12
  // Predicated region
  $region2: #{textnet_forward.1} parent=0 // pred_check
    _
  $region3: #{textnet_forward.1} parent=0 // pred_check_branch
    %17 = sbr.rel (0) target = $region5
  $region4: #{textnet_forward.1} parent=0 // pred_region
    _
  $region5: #{textnet_forward.1} parent=0 // pred_fallthru
    _
  // Predicated region
  $region6: #{textnet_forward.1} parent=0 // pred_check
    _
  $region7: #{textnet_forward.1} parent=0 // pred_check_branch
    %19 = sbr.rel (0) target = $region9
  $region8: #{textnet_forward.1} parent=0 // pred_region
    _
  $region9: #{textnet_forward.1} parent=0 // pred_fallthru
    _
  // Predicated region
  $region10: #{textnet_forward.1} parent=0 // pred_check
    _
  $region11: #{textnet_forward.1} parent=0 // pred_check_branch
    %21 = sbr.rel (0) target = $region13
  $region12: #{textnet_forward.1} parent=0 // pred_region
    _
  $region13: #{textnet_forward.1} parent=0 // pred_fallthru
    _
  // Predicated region
  $region14: #{textnet_forward.1} parent=0 // pred_check
    _
  $region15: #{textnet_forward.1} parent=0 // pred_check_branch
    %23 = sbr.rel (0) target = $region17
  $region16: #{textnet_forward.1} parent=0 // pred_region
    _
  $region17: #{textnet_forward.1} parent=0 // pred_fallthru
    _
  // Predicated region
  $region18: #{textnet_forward.1} parent=0 // pred_check
    _
  $region19: #{textnet_forward.1} parent=0 // pred_check_branch
    %25 = sbr.rel (0) target = $region21
  $region20: #{textnet_forward.1} parent=0 // pred_region
    _
  $region21: #{textnet_forward.1} parent=0 // pred_fallthru
    _
  // Predicated region
  $region22: #{textnet_forward.1} parent=0 // pred_check
    _
  $region23: #{textnet_forward.1} parent=0 // pred_check_branch
    %27 = sbr.rel (0) target = $region25
  $region24: #{textnet_forward.1} parent=0 // pred_region
    _
  $region25: #{textnet_forward.1} parent=0 // pred_fallthru
    _
  // Predicated region
  $region26: #{textnet_forward.1} parent=0 // pred_check
    _
  $region27: #{textnet_forward.1} parent=0 // pred_check_branch
    %29 = sbr.rel (0) target = $region29
  $region28: #{textnet_forward.1} parent=0 // pred_region
    _
  $region29: #{textnet_forward.1} parent=0 // pred_fallthru
    _
  // Predicated region
  $region30: #{textnet_forward.1} parent=0 // pred_check
    _
  $region31: #{textnet_forward.1} parent=0 // pred_check_branch
    %31 = sbr.rel (0) target = $region33
  $region32: #{textnet_forward.1} parent=0 // pred_region
    _
  $region33: #{textnet_forward.1} parent=0 // pred_fallthru
    _
  // Predicated region
  $region34: #{textnet_forward.1} parent=0 // pred_check
    _
  $region35: #{textnet_forward.1} parent=0 // pred_check_branch
    %33 = sbr.rel (0) target = $region37
  $region36: #{textnet_forward.1} parent=0 // pred_region
    _
  $region37: #{textnet_forward.1} parent=0 // pred_fallthru
    _
  %v35 = vld [vmem:[%s0] sm:$0xf]
  %v36 = vld [vmem:[%s0 + $0x4] sm:$0xf]
  %v37 = vld [vmem:[%s1] sm:$0xff]
  %v38 = vld [vmem:[%s1 + $0x8] sm:$0xff]
  %v39 = vld [vmem:[%s1 + $0x10] sm:$0xff]
  %v40 = vld [vmem:[%s1 + $0x18] sm:$0xff]
  %v41 = vld [vmem:[%s1 + $0x20] sm:$0xff]
  %v42 = vld [vmem:[%s1 + $0x28] sm:$0xff]
  %v43 = vld [vmem:[%s1 + $0x30] sm:$0xff]
  %v44 = vld [vmem:[%s1 + $0x38] sm:$0xff]
  %v45 = vld [vmem:[%s2] sm:$0xf]
  %v47 = vlaneseq
  %v48 = vshrl.u32 %v47, 7
  %v49 = vsub.s32 0, %v48
  %v50 = vrot.slane %v45, %v49
  %v51 = vlaneseq
  %v52 = vshrl.u32 %v51, 7
  %v53 = vsub.s32 1, %v52
  %v54 = vrot.slane %v45, %v53
  %v55 = vlaneseq
  %v56 = vshrl.u32 %v55, 7
  %v57 = vsub.s32 2, %v56
  %v58 = vrot.slane %v45, %v57
  %v59 = vlaneseq
  %v60 = vshrl.u32 %v59, 7
  %v61 = vsub.s32 3, %v60
  %v62 = vrot.slane %v45, %v61
  %v69 = vunpack.c.l.b16 %v35
  %v70 = vunpack.c.l.b16 %v36
  %v71 = vpack.c.b16 %v70, %v69
  %v80 = vunpack.c.l.b16 %v37
  %v81 = vunpack.c.h.b16 %v37
  %v82 = vunpack.c.l.b16 %v38
  %v83 = vunpack.c.h.b16 %v38
  %v84 = vunpack.c.l.b16 %v39
  %v85 = vunpack.c.h.b16 %v39
  %v86 = vunpack.c.l.b16 %v40
  %v87 = vunpack.c.h.b16 %v40
  %v88 = vunpack.c.l.b16 %v41
  %v89 = vunpack.c.h.b16 %v41
  %v90 = vunpack.c.l.b16 %v42
  %v91 = vunpack.c.h.b16 %v42
  %v92 = vunpack.c.l.b16 %v43
  %v93 = vunpack.c.h.b16 %v43
  %v94 = vunpack.c.l.b16 %v44
  %v95 = vunpack.c.h.b16 %v44
  %v96 = vpack.c.b16 %v84, %v80
  %v97 = vpack.c.b16 %v85, %v81
  %v98 = vpack.c.b16 %v86, %v82
  %v99 = vpack.c.b16 %v87, %v83
  %v100 = vpack.c.b16 %v92, %v88
  %v101 = vpack.c.b16 %v93, %v89
  %v102 = vpack.c.b16 %v94, %v90
  %v103 = vpack.c.b16 %v95, %v91
  %vm112 = vcmask 261120
  %v114 = vsel %vm112, %v71, 0
  %116 = vmatprep.subr.bf16.mxu0 %v97
  %117 = vmatpush1.bf16.msra.mxu0 %v96
  %118 = vmatprep.subr.bf16.mxu0 %v101
  %119 = vmatpush1.bf16.msra.mxu0 %v100
  %120 = vmatprep.subr.bf16.mxu0 0
  %121 = vmatpush1.bf16.msra.mxu0 0
  %122 = vmatprep.subr.bf16.mxu0 0
  %123 = vmatpush1.bf16.msra.mxu0 0
  %124 = vmatprep.subr.bf16.mxu0 0
  %125 = vmatpush1.bf16.msra.mxu0 0
  %126 = vmatprep.subr.bf16.mxu0 0
  %127 = vmatpush1.bf16.msra.mxu0 0
  %128 = vmatprep.subr.bf16.mxu0 0
  %129 = vmatpush1.bf16.msra.mxu0 0
  %130 = vmatprep.subr.bf16.mxu0 0
  %131 = vmatpush1.bf16.msra.mxu0 0
  %132 = vmatprep.subr.bf16.mxu0 0
  %133 = vmatpush1.bf16.msra.mxu0 0
  %134 = vmatprep.subr.bf16.mxu0 0
  %135 = vmatpush1.bf16.msra.mxu0 0
  %136 = vmatprep.subr.bf16.mxu0 0
  %137 = vmatpush1.bf16.msra.mxu0 0
  %138 = vmatprep.subr.bf16.mxu0 0
  %139 = vmatpush1.bf16.msra.mxu0 0
  %140 = vmatprep.subr.bf16.mxu0 0
  %141 = vmatpush1.bf16.msra.mxu0 0
  %142 = vmatprep.subr.bf16.mxu0 0
  %143 = vmatpush1.bf16.msra.mxu0 0
  %144 = vmatprep.subr.bf16.mxu0 0
  %145 = vmatpush1.bf16.msra.mxu0 0
  %146 = vmatprep.subr.bf16.mxu0 0
  %147 = vmatpush1.bf16.msra.mxu0 0
  %148 = vmatprep.mubr.bf16.mxu0 0
  %149 = vmatmul.mubr.bf16.gmra.mrb[0].mxu0 %v114
  %v150 = vpop.f32.mrb[0].mxu0
  %v151 = vadd.f32 %v50, %v150
  %v152 = vpop.f32.mrb[0].mxu0
  %v153 = vadd.f32 %v54, %v152
  %v154 = vpop.f32.mrb[0].mxu0
  %v155 = vadd.f32 %v50, %v154
  %v156 = vpop.f32.mrb[0].mxu0
  %v157 = vadd.f32 %v54, %v156
  %158 = vdwg.mxu0
  %159 = vmatprep.subr.bf16.mxu0 %v99
  %160 = vmatpush1.bf16.msra.mxu0 %v98
  %161 = vmatprep.subr.bf16.mxu0 %v103
  %162 = vmatpush1.bf16.msra.mxu0 %v102
  %163 = vmatprep.subr.bf16.mxu0 0
  %164 = vmatpush1.bf16.msra.mxu0 0
  %165 = vmatprep.subr.bf16.mxu0 0
  %166 = vmatpush1.bf16.msra.mxu0 0
  %167 = vmatprep.subr.bf16.mxu0 0
  %168 = vmatpush1.bf16.msra.mxu0 0
  %169 = vmatprep.subr.bf16.mxu0 0
  %170 = vmatpush1.bf16.msra.mxu0 0
  %171 = vmatprep.subr.bf16.mxu0 0
  %172 = vmatpush1.bf16.msra.mxu0 0
  %173 = vmatprep.subr.bf16.mxu0 0
  %174 = vmatpush1.bf16.msra.mxu0 0
  %175 = vmatprep.subr.bf16.mxu0 0
  %176 = vmatpush1.bf16.msra.mxu0 0
  %177 = vmatprep.subr.bf16.mxu0 0
  %178 = vmatpush1.bf16.msra.mxu0 0
  %179 = vmatprep.subr.bf16.mxu0 0
  %180 = vmatpush1.bf16.msra.mxu0 0
  %181 = vmatprep.subr.bf16.mxu0 0
  %182 = vmatpush1.bf16.msra.mxu0 0
  %183 = vmatprep.subr.bf16.mxu0 0
  %184 = vmatpush1.bf16.msra.mxu0 0
  %185 = vmatprep.subr.bf16.mxu0 0
  %186 = vmatpush1.bf16.msra.mxu0 0
  %187 = vmatprep.subr.bf16.mxu0 0
  %188 = vmatpush1.bf16.msra.mxu0 0
  %189 = vmatprep.subr.bf16.mxu0 0
  %190 = vmatpush1.bf16.msra.mxu0 0
  %191 = vmatprep.mubr.bf16.mxu0 0
  %192 = vmatmul.mubr.bf16.gmra.mrb[0].mxu0 %v114
  %v193 = vpop.f32.mrb[0].mxu0
  %v194 = vadd.f32 %v58, %v193
  %v195 = vpop.f32.mrb[0].mxu0
  %v196 = vadd.f32 %v62, %v195
  %v197 = vpop.f32.mrb[0].mxu0
  %v198 = vadd.f32 %v58, %v197
  %v199 = vpop.f32.mrb[0].mxu0
  %v200 = vadd.f32 %v62, %v199
  %201 = vdwg.mxu0
  %v202 = vmax.f32 %v151, 0.0
  %v203 = vmax.f32 %v153, 0.0
  %v204 = vmax.f32 %v194, 0.0
  %v205 = vmax.f32 %v196, 0.0
  %v206 = vmax.f32 %v155, 0.0
  %v207 = vmax.f32 %v157, 0.0
  %v208 = vmax.f32 %v198, 0.0
  %v209 = vmax.f32 %v200, 0.0
  %v210 = vpack.c.bf16 %v206, %v202
  %v211 = vpack.c.bf16 %v207, %v203
  %v212 = vpack.c.bf16 %v208, %v204
  %v213 = vpack.c.bf16 %v209, %v205
  %v214 = vld [vmem:[%s3] sm:$0xff]
  %v215 = vld [vmem:[%s3 + $0x8] sm:$0xff]
  %v216 = vld [vmem:[%s3 + $0x10] sm:$0xff]
  %v217 = vld [vmem:[%s3 + $0x18] sm:$0xff]
  %v218 = vld [vmem:[%s3 + $0x20] sm:$0xff]
  %v219 = vld [vmem:[%s3 + $0x28] sm:$0xff]
  %v220 = vld [vmem:[%s3 + $0x30] sm:$0xff]
  %v221 = vld [vmem:[%s3 + $0x38] sm:$0xff]
  %v222 = vld [vmem:[%s3 + $0x40] sm:$0xff]
  %v223 = vld [vmem:[%s3 + $0x48] sm:$0xff]
  %v224 = vld [vmem:[%s3 + $0x50] sm:$0xff]
  %v225 = vld [vmem:[%s3 + $0x58] sm:$0xff]
  %v226 = vld [vmem:[%s3 + $0x60] sm:$0xff]
  %v227 = vld [vmem:[%s3 + $0x68] sm:$0xff]
  %v228 = vld [vmem:[%s3 + $0x70] sm:$0xff]
  %v229 = vld [vmem:[%s3 + $0x78] sm:$0xff]
  %v230 = vld [vmem:[%s3 + $0x80] sm:$0xff]
  %v231 = vld [vmem:[%s3 + $0x88] sm:$0xff]
  %v232 = vld [vmem:[%s3 + $0x90] sm:$0xff]
  %v233 = vld [vmem:[%s3 + $0x98] sm:$0xff]
  %v234 = vld [vmem:[%s3 + $0xa0] sm:$0xff]
  %v235 = vld [vmem:[%s3 + $0xa8] sm:$0xff]
  %v236 = vld [vmem:[%s3 + $0xb0] sm:$0xff]
  %v237 = vld [vmem:[%s3 + $0xb8] sm:$0xff]
  %v238 = vld [vmem:[%s3 + $0xc0] sm:$0xff]
  %v239 = vld [vmem:[%s3 + $0xc8] sm:$0xff]
  %v240 = vld [vmem:[%s3 + $0xd0] sm:$0xff]
  %v241 = vld [vmem:[%s3 + $0xd8] sm:$0xff]
  %v242 = vld [vmem:[%s3 + $0xe0] sm:$0xff]
  %v243 = vld [vmem:[%s3 + $0xe8] sm:$0xff]
  %v244 = vld [vmem:[%s3 + $0xf0] sm:$0xff]
  %v245 = vld [vmem:[%s3 + $0xf8] sm:$0xff]
  %v246 = vld [vmem:[%s3 + $0x100] sm:$0xff]
  %v247 = vld [vmem:[%s3 + $0x108] sm:$0xff]
  %v248 = vld [vmem:[%s3 + $0x110] sm:$0xff]
  %v249 = vld [vmem:[%s3 + $0x118] sm:$0xff]
  %v250 = vld [vmem:[%s3 + $0x120] sm:$0xff]
  %v251 = vld [vmem:[%s3 + $0x128] sm:$0xff]
  %v252 = vld [vmem:[%s3 + $0x130] sm:$0xff]
  %v253 = vld [vmem:[%s3 + $0x138] sm:$0xff]
  %v254 = vld [vmem:[%s3 + $0x140] sm:$0xff]
  %v255 = vld [vmem:[%s3 + $0x148] sm:$0xff]
  %v256 = vld [vmem:[%s3 + $0x150] sm:$0xff]
  %v257 = vld [vmem:[%s3 + $0x158] sm:$0xff]
  %v258 = vld [vmem:[%s3 + $0x160] sm:$0xff]
  %v259 = vld [vmem:[%s3 + $0x168] sm:$0xff]
  %v260 = vld [vmem:[%s3 + $0x170] sm:$0xff]
  %v261 = vld [vmem:[%s3 + $0x178] sm:$0xff]
  %v262 = vld [vmem:[%s3 + $0x180] sm:$0xff]
  %v263 = vld [vmem:[%s3 + $0x188] sm:$0xff]
  %v264 = vld [vmem:[%s3 + $0x190] sm:$0xff]
  %v265 = vld [vmem:[%s3 + $0x198] sm:$0xff]
  %v266 = vld [vmem:[%s3 + $0x1a0] sm:$0xff]
  %v267 = vld [vmem:[%s3 + $0x1a8] sm:$0xff]
  %v268 = vld [vmem:[%s3 + $0x1b0] sm:$0xff]
  %v269 = vld [vmem:[%s3 + $0x1b8] sm:$0xff]
  %v270 = vld [vmem:[%s3 + $0x1c0] sm:$0xff]
  %v271 = vld [vmem:[%s3 + $0x1c8] sm:$0xff]
  %v272 = vld [vmem:[%s3 + $0x1d0] sm:$0xff]
  %v273 = vld [vmem:[%s3 + $0x1d8] sm:$0xff]
  %v274 = vld [vmem:[%s3 + $0x1e0] sm:$0xff]
  %v275 = vld [vmem:[%s3 + $0x1e8] sm:$0xff]
  %v276 = vld [vmem:[%s3 + $0x1f0] sm:$0xff]
  %v277 = vld [vmem:[%s3 + $0x1f8] sm:$0xff]
  %v278 = vld [vmem:[%s3 + $0x200] sm:$0xff]
  %v279 = vld [vmem:[%s3 + $0x208] sm:$0xff]
  %v280 = vld [vmem:[%s3 + $0x210] sm:$0xff]
  %v281 = vld [vmem:[%s3 + $0x218] sm:$0xff]
  %v282 = vld [vmem:[%s3 + $0x220] sm:$0xff]
  %v283 = vld [vmem:[%s3 + $0x228] sm:$0xff]
  %v284 = vld [vmem:[%s3 + $0x230] sm:$0xff]
  %v285 = vld [vmem:[%s3 + $0x238] sm:$0xff]
  %v286 = vld [vmem:[%s3 + $0x240] sm:$0xff]
  %v287 = vld [vmem:[%s3 + $0x248] sm:$0xff]
  %v288 = vld [vmem:[%s3 + $0x250] sm:$0xff]
  %v289 = vld [vmem:[%s3 + $0x258] sm:$0xff]
  %v290 = vld [vmem:[%s3 + $0x260] sm:$0xff]
  %v291 = vld [vmem:[%s3 + $0x268] sm:$0xff]
  %v292 = vld [vmem:[%s3 + $0x270] sm:$0xff]
  %v293 = vld [vmem:[%s3 + $0x278] sm:$0xff]
  %v294 = vld [vmem:[%s3 + $0x280] sm:$0xff]
  %v295 = vld [vmem:[%s3 + $0x288] sm:$0xff]
  %v296 = vld [vmem:[%s3 + $0x290] sm:$0xff]
  %v297 = vld [vmem:[%s3 + $0x298] sm:$0xff]
  %v298 = vld [vmem:[%s3 + $0x2a0] sm:$0xff]
  %v299 = vld [vmem:[%s3 + $0x2a8] sm:$0xff]
  %v300 = vld [vmem:[%s3 + $0x2b0] sm:$0xff]
  %v301 = vld [vmem:[%s3 + $0x2b8] sm:$0xff]
  %v302 = vld [vmem:[%s3 + $0x2c0] sm:$0xff]
  %v303 = vld [vmem:[%s3 + $0x2c8] sm:$0xff]
  %v304 = vld [vmem:[%s3 + $0x2d0] sm:$0xff]
  %v305 = vld [vmem:[%s3 + $0x2d8] sm:$0xff]
  %v306 = vld [vmem:[%s3 + $0x2e0] sm:$0xff]
  %v307 = vld [vmem:[%s3 + $0x2e8] sm:$0xff]
  %v308 = vld [vmem:[%s3 + $0x2f0] sm:$0xff]
  %v309 = vld [vmem:[%s3 + $0x2f8] sm:$0xff]
  %v310 = vld [vmem:[%s3 + $0x300] sm:$0xff]
  %v311 = vld [vmem:[%s3 + $0x308] sm:$0xff]
  %v312 = vld [vmem:[%s3 + $0x310] sm:$0xff]
  %v313 = vld [vmem:[%s3 + $0x318] sm:$0xff]
  %v314 = vld [vmem:[%s3 + $0x320] sm:$0xff]
  %v315 = vld [vmem:[%s3 + $0x328] sm:$0xff]
  %v316 = vld [vmem:[%s3 + $0x330] sm:$0xff]
  %v317 = vld [vmem:[%s3 + $0x338] sm:$0xff]
  %v318 = vld [vmem:[%s3 + $0x340] sm:$0xff]
  %v319 = vld [vmem:[%s3 + $0x348] sm:$0xff]
  %v320 = vld [vmem:[%s3 + $0x350] sm:$0xff]
  %v321 = vld [vmem:[%s3 + $0x358] sm:$0xff]
  %v322 = vld [vmem:[%s3 + $0x360] sm:$0xff]
  %v323 = vld [vmem:[%s3 + $0x368] sm:$0xff]
  %v324 = vld [vmem:[%s3 + $0x370] sm:$0xff]
  %v325 = vld [vmem:[%s3 + $0x378] sm:$0xff]
  %v326 = vld [vmem:[%s3 + $0x380] sm:$0xff]
  %v327 = vld [vmem:[%s3 + $0x388] sm:$0xff]
  %v328 = vld [vmem:[%s3 + $0x390] sm:$0xff]
  %v329 = vld [vmem:[%s3 + $0x398] sm:$0xff]
  %v330 = vld [vmem:[%s3 + $0x3a0] sm:$0xff]
  %v331 = vld [vmem:[%s3 + $0x3a8] sm:$0xff]
  %v332 = vld [vmem:[%s3 + $0x3b0] sm:$0xff]
  %v333 = vld [vmem:[%s3 + $0x3b8] sm:$0xff]
  %v334 = vld [vmem:[%s3 + $0x3c0] sm:$0xff]
  %v335 = vld [vmem:[%s3 + $0x3c8] sm:$0xff]
  %v336 = vld [vmem:[%s3 + $0x3d0] sm:$0xff]
  %v337 = vld [vmem:[%s3 + $0x3d8] sm:$0xff]
  %v338 = vld [vmem:[%s3 + $0x3e0] sm:$0xff]
  %v339 = vld [vmem:[%s3 + $0x3e8] sm:$0xff]
  %v340 = vld [vmem:[%s3 + $0x3f0] sm:$0xff]
  %v341 = vld [vmem:[%s3 + $0x3f8] sm:$0xff]
  %v342 = vld [vmem:[%s4] sm:$0xf]
  %v344 = vlaneseq
  %v345 = vshrl.u32 %v344, 7
  %v346 = vsub.s32 0, %v345
  %v347 = vrot.slane %v342, %v346
  %v348 = vlaneseq
  %v349 = vshrl.u32 %v348, 7
  %v350 = vsub.s32 1, %v349
  %v351 = vrot.slane %v342, %v350
  %v352 = vlaneseq
  %v353 = vshrl.u32 %v352, 7
  %v354 = vsub.s32 2, %v353
  %v355 = vrot.slane %v342, %v354
  %v356 = vlaneseq
  %v357 = vshrl.u32 %v356, 7
  %v358 = vsub.s32 3, %v357
  %v359 = vrot.slane %v342, %v358
  %v492 = vunpack.c.l.b16 %v214
  %v493 = vunpack.c.h.b16 %v214
  %v494 = vunpack.c.l.b16 %v215
  %v495 = vunpack.c.h.b16 %v215
  %v496 = vunpack.c.l.b16 %v216
  %v497 = vunpack.c.h.b16 %v216
  %v498 = vunpack.c.l.b16 %v217
  %v499 = vunpack.c.h.b16 %v217
  %v500 = vunpack.c.l.b16 %v218
  %v501 = vunpack.c.h.b16 %v218
  %v502 = vunpack.c.l.b16 %v219
  %v503 = vunpack.c.h.b16 %v219
  %v504 = vunpack.c.l.b16 %v220
  %v505 = vunpack.c.h.b16 %v220
  %v506 = vunpack.c.l.b16 %v221
  %v507 = vunpack.c.h.b16 %v221
  %v508 = vunpack.c.l.b16 %v222
  %v509 = vunpack.c.h.b16 %v222
  %v510 = vunpack.c.l.b16 %v223
  %v511 = vunpack.c.h.b16 %v223
  %v512 = vunpack.c.l.b16 %v224
  %v513 = vunpack.c.h.b16 %v224
  %v514 = vunpack.c.l.b16 %v225
  %v515 = vunpack.c.h.b16 %v225
  %v516 = vunpack.c.l.b16 %v226
  %v517 = vunpack.c.h.b16 %v226
  %v518 = vunpack.c.l.b16 %v227
  %v519 = vunpack.c.h.b16 %v227
  %v520 = vunpack.c.l.b16 %v228
  %v521 = vunpack.c.h.b16 %v228
  %v522 = vunpack.c.l.b16 %v229
  %v523 = vunpack.c.h.b16 %v229
  %v524 = vunpack.c.l.b16 %v230
  %v525 = vunpack.c.h.b16 %v230
  %v526 = vunpack.c.l.b16 %v231
  %v527 = vunpack.c.h.b16 %v231
  %v528 = vunpack.c.l.b16 %v232
  %v529 = vunpack.c.h.b16 %v232
  %v530 = vunpack.c.l.b16 %v233
  %v531 = vunpack.c.h.b16 %v233
  %v532 = vunpack.c.l.b16 %v234
  %v533 = vunpack.c.h.b16 %v234
  %v534 = vunpack.c.l.b16 %v235
  %v535 = vunpack.c.h.b16 %v235
  %v536 = vunpack.c.l.b16 %v236
  %v537 = vunpack.c.h.b16 %v236
  %v538 = vunpack.c.l.b16 %v237
  %v539 = vunpack.c.h.b16 %v237
  %v540 = vunpack.c.l.b16 %v238
  %v541 = vunpack.c.h.b16 %v238
  %v542 = vunpack.c.l.b16 %v239
  %v543 = vunpack.c.h.b16 %v239
  %v544 = vunpack.c.l.b16 %v240
  %v545 = vunpack.c.h.b16 %v240
  %v546 = vunpack.c.l.b16 %v241
  %v547 = vunpack.c.h.b16 %v241
  %v548 = vunpack.c.l.b16 %v242
  %v549 = vunpack.c.h.b16 %v242
  %v550 = vunpack.c.l.b16 %v243
  %v551 = vunpack.c.h.b16 %v243
  %v552 = vunpack.c.l.b16 %v244
  %v553 = vunpack.c.h.b16 %v244
  %v554 = vunpack.c.l.b16 %v245
  %v555 = vunpack.c.h.b16 %v245
  %v556 = vunpack.c.l.b16 %v246
  %v557 = vunpack.c.h.b16 %v246
  %v558 = vunpack.c.l.b16 %v247
  %v559 = vunpack.c.h.b16 %v247
  %v560 = vunpack.c.l.b16 %v248
  %v561 = vunpack.c.h.b16 %v248
  %v562 = vunpack.c.l.b16 %v249
  %v563 = vunpack.c.h.b16 %v249
  %v564 = vunpack.c.l.b16 %v250
  %v565 = vunpack.c.h.b16 %v250
  %v566 = vunpack.c.l.b16 %v251
  %v567 = vunpack.c.h.b16 %v251
  %v568 = vunpack.c.l.b16 %v252
  %v569 = vunpack.c.h.b16 %v252
  %v570 = vunpack.c.l.b16 %v253
  %v571 = vunpack.c.h.b16 %v253
  %v572 = vunpack.c.l.b16 %v254
  %v573 = vunpack.c.h.b16 %v254
  %v574 = vunpack.c.l.b16 %v255
  %v575 = vunpack.c.h.b16 %v255
  %v576 = vunpack.c.l.b16 %v256
  %v577 = vunpack.c.h.b16 %v256
  %v578 = vunpack.c.l.b16 %v257
  %v579 = vunpack.c.h.b16 %v257
  %v580 = vunpack.c.l.b16 %v258
  %v581 = vunpack.c.h.b16 %v258
  %v582 = vunpack.c.l.b16 %v259
  %v583 = vunpack.c.h.b16 %v259
  %v584 = vunpack.c.l.b16 %v260
  %v585 = vunpack.c.h.b16 %v260
  %v586 = vunpack.c.l.b16 %v261
  %v587 = vunpack.c.h.b16 %v261
  %v588 = vunpack.c.l.b16 %v262
  %v589 = vunpack.c.h.b16 %v262
  %v590 = vunpack.c.l.b16 %v263
  %v591 = vunpack.c.h.b16 %v263
  %v592 = vunpack.c.l.b16 %v264
  %v593 = vunpack.c.h.b16 %v264
  %v594 = vunpack.c.l.b16 %v265
  %v595 = vunpack.c.h.b16 %v265
  %v596 = vunpack.c.l.b16 %v266
  %v597 = vunpack.c.h.b16 %v266
  %v598 = vunpack.c.l.b16 %v267
  %v599 = vunpack.c.h.b16 %v267
  %v600 = vunpack.c.l.b16 %v268
  %v601 = vunpack.c.h.b16 %v268
  %v602 = vunpack.c.l.b16 %v269
  %v603 = vunpack.c.h.b16 %v269
  %v604 = vunpack.c.l.b16 %v270
  %v605 = vunpack.c.h.b16 %v270
  %v606 = vunpack.c.l.b16 %v271
  %v607 = vunpack.c.h.b16 %v271
  %v608 = vunpack.c.l.b16 %v272
  %v609 = vunpack.c.h.b16 %v272
  %v610 = vunpack.c.l.b16 %v273
  %v611 = vunpack.c.h.b16 %v273
  %v612 = vunpack.c.l.b16 %v274
  %v613 = vunpack.c.h.b16 %v274
  %v614 = vunpack.c.l.b16 %v275
  %v615 = vunpack.c.h.b16 %v275
  %v616 = vunpack.c.l.b16 %v276
  %v617 = vunpack.c.h.b16 %v276
  %v618 = vunpack.c.l.b16 %v277
  %v619 = vunpack.c.h.b16 %v277
  %v620 = vunpack.c.l.b16 %v278
  %v621 = vunpack.c.h.b16 %v278
  %v622 = vunpack.c.l.b16 %v279
  %v623 = vunpack.c.h.b16 %v279
  %v624 = vunpack.c.l.b16 %v280
  %v625 = vunpack.c.h.b16 %v280
  %v626 = vunpack.c.l.b16 %v281
  %v627 = vunpack.c.h.b16 %v281
  %v628 = vunpack.c.l.b16 %v282
  %v629 = vunpack.c.h.b16 %v282
  %v630 = vunpack.c.l.b16 %v283
  %v631 = vunpack.c.h.b16 %v283
  %v632 = vunpack.c.l.b16 %v284
  %v633 = vunpack.c.h.b16 %v284
  %v634 = vunpack.c.l.b16 %v285
  %v635 = vunpack.c.h.b16 %v285
  %v636 = vunpack.c.l.b16 %v286
  %v637 = vunpack.c.h.b16 %v286
  %v638 = vunpack.c.l.b16 %v287
  %v639 = vunpack.c.h.b16 %v287
  %v640 = vunpack.c.l.b16 %v288
  %v641 = vunpack.c.h.b16 %v288
  %v642 = vunpack.c.l.b16 %v289
  %v643 = vunpack.c.h.b16 %v289
  %v644 = vunpack.c.l.b16 %v290
  %v645 = vunpack.c.h.b16 %v290
  %v646 = vunpack.c.l.b16 %v291
  %v647 = vunpack.c.h.b16 %v291
  %v648 = vunpack.c.l.b16 %v292
  %v649 = vunpack.c.h.b16 %v292
  %v650 = vunpack.c.l.b16 %v293
  %v651 = vunpack.c.h.b16 %v293
  %v652 = vunpack.c.l.b16 %v294
  %v653 = vunpack.c.h.b16 %v294
  %v654 = vunpack.c.l.b16 %v295
  %v655 = vunpack.c.h.b16 %v295
  %v656 = vunpack.c.l.b16 %v296
  %v657 = vunpack.c.h.b16 %v296
  %v658 = vunpack.c.l.b16 %v297
  %v659 = vunpack.c.h.b16 %v297
  %v660 = vunpack.c.l.b16 %v298
  %v661 = vunpack.c.h.b16 %v298
  %v662 = vunpack.c.l.b16 %v299
  %v663 = vunpack.c.h.b16 %v299
  %v664 = vunpack.c.l.b16 %v300
  %v665 = vunpack.c.h.b16 %v300
  %v666 = vunpack.c.l.b16 %v301
  %v667 = vunpack.c.h.b16 %v301
  %v668 = vunpack.c.l.b16 %v302
  %v669 = vunpack.c.h.b16 %v302
  %v670 = vunpack.c.l.b16 %v303
  %v671 = vunpack.c.h.b16 %v303
  %v672 = vunpack.c.l.b16 %v304
  %v673 = vunpack.c.h.b16 %v304
  %v674 = vunpack.c.l.b16 %v305
  %v675 = vunpack.c.h.b16 %v305
  %v676 = vunpack.c.l.b16 %v306
  %v677 = vunpack.c.h.b16 %v306
  %v678 = vunpack.c.l.b16 %v307
  %v679 = vunpack.c.h.b16 %v307
  %v680 = vunpack.c.l.b16 %v308
  %v681 = vunpack.c.h.b16 %v308
  %v682 = vunpack.c.l.b16 %v309
  %v683 = vunpack.c.h.b16 %v309
  %v684 = vunpack.c.l.b16 %v310
  %v685 = vunpack.c.h.b16 %v310
  %v686 = vunpack.c.l.b16 %v311
  %v687 = vunpack.c.h.b16 %v311
  %v688 = vunpack.c.l.b16 %v312
  %v689 = vunpack.c.h.b16 %v312
  %v690 = vunpack.c.l.b16 %v313
  %v691 = vunpack.c.h.b16 %v313
  %v692 = vunpack.c.l.b16 %v314
  %v693 = vunpack.c.h.b16 %v314
  %v694 = vunpack.c.l.b16 %v315
  %v695 = vunpack.c.h.b16 %v315
  %v696 = vunpack.c.l.b16 %v316
  %v697 = vunpack.c.h.b16 %v316
  %v698 = vunpack.c.l.b16 %v317
  %v699 = vunpack.c.h.b16 %v317
  %v700 = vunpack.c.l.b16 %v318
  %v701 = vunpack.c.h.b16 %v318
  %v702 = vunpack.c.l.b16 %v319
  %v703 = vunpack.c.h.b16 %v319
  %v704 = vunpack.c.l.b16 %v320
  %v705 = vunpack.c.h.b16 %v320
  %v706 = vunpack.c.l.b16 %v321
  %v707 = vunpack.c.h.b16 %v321
  %v708 = vunpack.c.l.b16 %v322
  %v709 = vunpack.c.h.b16 %v322
  %v710 = vunpack.c.l.b16 %v323
  %v711 = vunpack.c.h.b16 %v323
  %v712 = vunpack.c.l.b16 %v324
  %v713 = vunpack.c.h.b16 %v324
  %v714 = vunpack.c.l.b16 %v325
  %v715 = vunpack.c.h.b16 %v325
  %v716 = vunpack.c.l.b16 %v326
  %v717 = vunpack.c.h.b16 %v326
  %v718 = vunpack.c.l.b16 %v327
  %v719 = vunpack.c.h.b16 %v327
  %v720 = vunpack.c.l.b16 %v328
  %v721 = vunpack.c.h.b16 %v328
  %v722 = vunpack.c.l.b16 %v329
  %v723 = vunpack.c.h.b16 %v329
  %v724 = vunpack.c.l.b16 %v330
  %v725 = vunpack.c.h.b16 %v330
  %v726 = vunpack.c.l.b16 %v331
  %v727 = vunpack.c.h.b16 %v331
  %v728 = vunpack.c.l.b16 %v332
  %v729 = vunpack.c.h.b16 %v332
  %v730 = vunpack.c.l.b16 %v333
  %v731 = vunpack.c.h.b16 %v333
  %v732 = vunpack.c.l.b16 %v334
  %v733 = vunpack.c.h.b16 %v334
  %v734 = vunpack.c.l.b16 %v335
  %v735 = vunpack.c.h.b16 %v335
  %v736 = vunpack.c.l.b16 %v336
  %v737 = vunpack.c.h.b16 %v336
  %v738 = vunpack.c.l.b16 %v337
  %v739 = vunpack.c.h.b16 %v337
  %v740 = vunpack.c.l.b16 %v338
  %v741 = vunpack.c.h.b16 %v338
  %v742 = vunpack.c.l.b16 %v339
  %v743 = vunpack.c.h.b16 %v339
  %v744 = vunpack.c.l.b16 %v340
  %v745 = vunpack.c.h.b16 %v340
  %v746 = vunpack.c.l.b16 %v341
  %v747 = vunpack.c.h.b16 %v341
  %v748 = vpack.c.b16 %v496, %v492
  %v749 = vpack.c.b16 %v497, %v493
  %v750 = vpack.c.b16 %v498, %v494
  %v751 = vpack.c.b16 %v499, %v495
  %v752 = vpack.c.b16 %v504, %v500
  %v753 = vpack.c.b16 %v505, %v501
  %v754 = vpack.c.b16 %v506, %v502
  %v755 = vpack.c.b16 %v507, %v503
  %v756 = vpack.c.b16 %v512, %v508
  %v757 = vpack.c.b16 %v513, %v509
  %v758 = vpack.c.b16 %v514, %v510
  %v759 = vpack.c.b16 %v515, %v511
  %v760 = vpack.c.b16 %v520, %v516
  %v761 = vpack.c.b16 %v521, %v517
  %v762 = vpack.c.b16 %v522, %v518
  %v763 = vpack.c.b16 %v523, %v519
  %v764 = vpack.c.b16 %v528, %v524
  %v765 = vpack.c.b16 %v529, %v525
  %v766 = vpack.c.b16 %v530, %v526
  %v767 = vpack.c.b16 %v531, %v527
  %v768 = vpack.c.b16 %v536, %v532
  %v769 = vpack.c.b16 %v537, %v533
  %v770 = vpack.c.b16 %v538, %v534
  %v771 = vpack.c.b16 %v539, %v535
  %v772 = vpack.c.b16 %v544, %v540
  %v773 = vpack.c.b16 %v545, %v541
  %v774 = vpack.c.b16 %v546, %v542
  %v775 = vpack.c.b16 %v547, %v543
  %v776 = vpack.c.b16 %v552, %v548
  %v777 = vpack.c.b16 %v553, %v549
  %v778 = vpack.c.b16 %v554, %v550
  %v779 = vpack.c.b16 %v555, %v551
  %v780 = vpack.c.b16 %v560, %v556
  %v781 = vpack.c.b16 %v561, %v557
  %v782 = vpack.c.b16 %v562, %v558
  %v783 = vpack.c.b16 %v563, %v559
  %v784 = vpack.c.b16 %v568, %v564
  %v785 = vpack.c.b16 %v569, %v565
  %v786 = vpack.c.b16 %v570, %v566
  %v787 = vpack.c.b16 %v571, %v567
  %v788 = vpack.c.b16 %v576, %v572
  %v789 = vpack.c.b16 %v577, %v573
  %v790 = vpack.c.b16 %v578, %v574
  %v791 = vpack.c.b16 %v579, %v575
  %v792 = vpack.c.b16 %v584, %v580
  %v793 = vpack.c.b16 %v585, %v581
  %v794 = vpack.c.b16 %v586, %v582
  %v795 = vpack.c.b16 %v587, %v583
  %v796 = vpack.c.b16 %v592, %v588
  %v797 = vpack.c.b16 %v593, %v589
  %v798 = vpack.c.b16 %v594, %v590
  %v799 = vpack.c.b16 %v595, %v591
  %v800 = vpack.c.b16 %v600, %v596
  %v801 = vpack.c.b16 %v601, %v597
  %v802 = vpack.c.b16 %v602, %v598
  %v803 = vpack.c.b16 %v603, %v599
  %v804 = vpack.c.b16 %v608, %v604
  %v805 = vpack.c.b16 %v609, %v605
  %v806 = vpack.c.b16 %v610, %v606
  %v807 = vpack.c.b16 %v611, %v607
  %v808 = vpack.c.b16 %v616, %v612
  %v809 = vpack.c.b16 %v617, %v613
  %v810 = vpack.c.b16 %v618, %v614
  %v811 = vpack.c.b16 %v619, %v615
  %v812 = vpack.c.b16 %v624, %v620
  %v813 = vpack.c.b16 %v625, %v621
  %v814 = vpack.c.b16 %v626, %v622
  %v815 = vpack.c.b16 %v627, %v623
  %v816 = vpack.c.b16 %v632, %v628
  %v817 = vpack.c.b16 %v633, %v629
  %v818 = vpack.c.b16 %v634, %v630
  %v819 = vpack.c.b16 %v635, %v631
  %v820 = vpack.c.b16 %v640, %v636
  %v821 = vpack.c.b16 %v641, %v637
  %v822 = vpack.c.b16 %v642, %v638
  %v823 = vpack.c.b16 %v643, %v639
  %v824 = vpack.c.b16 %v648, %v644
  %v825 = vpack.c.b16 %v649, %v645
  %v826 = vpack.c.b16 %v650, %v646
  %v827 = vpack.c.b16 %v651, %v647
  %v828 = vpack.c.b16 %v656, %v652
  %v829 = vpack.c.b16 %v657, %v653
  %v830 = vpack.c.b16 %v658, %v654
  %v831 = vpack.c.b16 %v659, %v655
  %v832 = vpack.c.b16 %v664, %v660
  %v833 = vpack.c.b16 %v665, %v661
  %v834 = vpack.c.b16 %v666, %v662
  %v835 = vpack.c.b16 %v667, %v663
  %v836 = vpack.c.b16 %v672, %v668
  %v837 = vpack.c.b16 %v673, %v669
  %v838 = vpack.c.b16 %v674, %v670
  %v839 = vpack.c.b16 %v675, %v671
  %v840 = vpack.c.b16 %v680, %v676
  %v841 = vpack.c.b16 %v681, %v677
  %v842 = vpack.c.b16 %v682, %v678
  %v843 = vpack.c.b16 %v683, %v679
  %v844 = vpack.c.b16 %v688, %v684
  %v845 = vpack.c.b16 %v689, %v685
  %v846 = vpack.c.b16 %v690, %v686
  %v847 = vpack.c.b16 %v691, %v687
  %v848 = vpack.c.b16 %v696, %v692
  %v849 = vpack.c.b16 %v697, %v693
  %v850 = vpack.c.b16 %v698, %v694
  %v851 = vpack.c.b16 %v699, %v695
  %v852 = vpack.c.b16 %v704, %v700
  %v853 = vpack.c.b16 %v705, %v701
  %v854 = vpack.c.b16 %v706, %v702
  %v855 = vpack.c.b16 %v707, %v703
  %v856 = vpack.c.b16 %v712, %v708
  %v857 = vpack.c.b16 %v713, %v709
  %v858 = vpack.c.b16 %v714, %v710
  %v859 = vpack.c.b16 %v715, %v711
  %v860 = vpack.c.b16 %v720, %v716
  %v861 = vpack.c.b16 %v721, %v717
  %v862 = vpack.c.b16 %v722, %v718
  %v863 = vpack.c.b16 %v723, %v719
  %v864 = vpack.c.b16 %v728, %v724
  %v865 = vpack.c.b16 %v729, %v725
  %v866 = vpack.c.b16 %v730, %v726
  %v867 = vpack.c.b16 %v731, %v727
  %v868 = vpack.c.b16 %v736, %v732
  %v869 = vpack.c.b16 %v737, %v733
  %v870 = vpack.c.b16 %v738, %v734
  %v871 = vpack.c.b16 %v739, %v735
  %v872 = vpack.c.b16 %v744, %v740
  %v873 = vpack.c.b16 %v745, %v741
  %v874 = vpack.c.b16 %v746, %v742
  %v875 = vpack.c.b16 %v747, %v743
  %1004 = vmatprep.subr.bf16.mxu0 %v749
  %1005 = vmatpush1.bf16.msra.mxu0 %v748
  %1006 = vmatprep.subr.bf16.mxu0 %v753
  %1007 = vmatpush1.bf16.msra.mxu0 %v752
  %1008 = vmatprep.subr.bf16.mxu0 %v757
  %1009 = vmatpush1.bf16.msra.mxu0 %v756
  %1010 = vmatprep.subr.bf16.mxu0 %v761
  %1011 = vmatpush1.bf16.msra.mxu0 %v760
  %1012 = vmatprep.subr.bf16.mxu0 %v765
  %1013 = vmatpush1.bf16.msra.mxu0 %v764
  %1014 = vmatprep.subr.bf16.mxu0 %v769
  %1015 = vmatpush1.bf16.msra.mxu0 %v768
  %1016 = vmatprep.subr.bf16.mxu0 %v773
  %1017 = vmatpush1.bf16.msra.mxu0 %v772
  %1018 = vmatprep.subr.bf16.mxu0 %v777
  %1019 = vmatpush1.bf16.msra.mxu0 %v776
  %1020 = vmatprep.subr.bf16.mxu0 %v781
  %1021 = vmatpush1.bf16.msra.mxu0 %v780
  %1022 = vmatprep.subr.bf16.mxu0 %v785
  %1023 = vmatpush1.bf16.msra.mxu0 %v784
  %1024 = vmatprep.subr.bf16.mxu0 %v789
  %1025 = vmatpush1.bf16.msra.mxu0 %v788
  %1026 = vmatprep.subr.bf16.mxu0 %v793
  %1027 = vmatpush1.bf16.msra.mxu0 %v792
  %1028 = vmatprep.subr.bf16.mxu0 %v797
  %1029 = vmatpush1.bf16.msra.mxu0 %v796
  %1030 = vmatprep.subr.bf16.mxu0 %v801
  %1031 = vmatpush1.bf16.msra.mxu0 %v800
  %1032 = vmatprep.subr.bf16.mxu0 %v805
  %1033 = vmatpush1.bf16.msra.mxu0 %v804
  %1034 = vmatprep.subr.bf16.mxu0 %v809
  %1035 = vmatpush1.bf16.msra.mxu0 %v808
  %1036 = vmatprep.mubr.bf16.mxu0 %v211
  %1037 = vmatmul.mubr.bf16.gmra.mrb[0].mxu0 %v210
  %v1038 = vpop.f32.mrb[0].mxu0
  %v1039 = vadd.f32 %v347, %v1038
  %v1040 = vpop.f32.mrb[0].mxu0
  %v1041 = vadd.f32 %v351, %v1040
  %v1042 = vpop.f32.mrb[0].mxu0
  %v1043 = vadd.f32 %v347, %v1042
  %v1044 = vpop.f32.mrb[0].mxu0
  %v1045 = vadd.f32 %v351, %v1044
  %1046 = vdwg.mxu0
  %1047 = vmatprep.subr.bf16.mxu0 %v813
  %1048 = vmatpush1.bf16.msra.mxu0 %v812
  %1049 = vmatprep.subr.bf16.mxu0 %v817
  %1050 = vmatpush1.bf16.msra.mxu0 %v816
  %1051 = vmatprep.subr.bf16.mxu0 %v821
  %1052 = vmatpush1.bf16.msra.mxu0 %v820
  %1053 = vmatprep.subr.bf16.mxu0 %v825
  %1054 = vmatpush1.bf16.msra.mxu0 %v824
  %1055 = vmatprep.subr.bf16.mxu0 %v829
  %1056 = vmatpush1.bf16.msra.mxu0 %v828
  %1057 = vmatprep.subr.bf16.mxu0 %v833
  %1058 = vmatpush1.bf16.msra.mxu0 %v832
  %1059 = vmatprep.subr.bf16.mxu0 %v837
  %1060 = vmatpush1.bf16.msra.mxu0 %v836
  %1061 = vmatprep.subr.bf16.mxu0 %v841
  %1062 = vmatpush1.bf16.msra.mxu0 %v840
  %1063 = vmatprep.subr.bf16.mxu0 %v845
  %1064 = vmatpush1.bf16.msra.mxu0 %v844
  %1065 = vmatprep.subr.bf16.mxu0 %v849
  %1066 = vmatpush1.bf16.msra.mxu0 %v848
  %1067 = vmatprep.subr.bf16.mxu0 %v853
  %1068 = vmatpush1.bf16.msra.mxu0 %v852
  %1069 = vmatprep.subr.bf16.mxu0 %v857
  %1070 = vmatpush1.bf16.msra.mxu0 %v856
  %1071 = vmatprep.subr.bf16.mxu0 %v861
  %1072 = vmatpush1.bf16.msra.mxu0 %v860
  %1073 = vmatprep.subr.bf16.mxu0 %v865
  %1074 = vmatpush1.bf16.msra.mxu0 %v864
  %1075 = vmatprep.subr.bf16.mxu0 %v869
  %1076 = vmatpush1.bf16.msra.mxu0 %v868
  %1077 = vmatprep.subr.bf16.mxu0 %v873
  %1078 = vmatpush1.bf16.msra.mxu0 %v872
  %1079 = vmatprep.mubr.bf16.mxu0 %v213
  %1080 = vmatmul.mubr.bf16.gmra.mrb[0].mxu0 %v212
  %v1081 = vpop.f32.mrb[0].mxu0
  %v1082 = vadd.f32 %v1039, %v1081
  %v1083 = vpop.f32.mrb[0].mxu0
  %v1084 = vadd.f32 %v1041, %v1083
  %v1085 = vpop.f32.mrb[0].mxu0
  %v1086 = vadd.f32 %v1043, %v1085
  %v1087 = vpop.f32.mrb[0].mxu0
  %v1088 = vadd.f32 %v1045, %v1087
  %1089 = vdwg.mxu0
  %1090 = vmatprep.subr.bf16.mxu0 %v751
  %1091 = vmatpush1.bf16.msra.mxu0 %v750
  %1092 = vmatprep.subr.bf16.mxu0 %v755
  %1093 = vmatpush1.bf16.msra.mxu0 %v754
  %1094 = vmatprep.subr.bf16.mxu0 %v759
  %1095 = vmatpush1.bf16.msra.mxu0 %v758
  %1096 = vmatprep.subr.bf16.mxu0 %v763
  %1097 = vmatpush1.bf16.msra.mxu0 %v762
  %1098 = vmatprep.subr.bf16.mxu0 %v767
  %1099 = vmatpush1.bf16.msra.mxu0 %v766
  %1100 = vmatprep.subr.bf16.mxu0 %v771
  %1101 = vmatpush1.bf16.msra.mxu0 %v770
  %1102 = vmatprep.subr.bf16.mxu0 %v775
  %1103 = vmatpush1.bf16.msra.mxu0 %v774
  %1104 = vmatprep.subr.bf16.mxu0 %v779
  %1105 = vmatpush1.bf16.msra.mxu0 %v778
  %1106 = vmatprep.subr.bf16.mxu0 %v783
  %1107 = vmatpush1.bf16.msra.mxu0 %v782
  %1108 = vmatprep.subr.bf16.mxu0 %v787
  %1109 = vmatpush1.bf16.msra.mxu0 %v786
  %1110 = vmatprep.subr.bf16.mxu0 %v791
  %1111 = vmatpush1.bf16.msra.mxu0 %v790
  %1112 = vmatprep.subr.bf16.mxu0 %v795
  %1113 = vmatpush1.bf16.msra.mxu0 %v794
  %1114 = vmatprep.subr.bf16.mxu0 %v799
  %1115 = vmatpush1.bf16.msra.mxu0 %v798
  %1116 = vmatprep.subr.bf16.mxu0 %v803
  %1117 = vmatpush1.bf16.msra.mxu0 %v802
  %1118 = vmatprep.subr.bf16.mxu0 %v807
  %1119 = vmatpush1.bf16.msra.mxu0 %v806
  %1120 = vmatprep.subr.bf16.mxu0 %v811
  %1121 = vmatpush1.bf16.msra.mxu0 %v810
  %1122 = vmatprep.mubr.bf16.mxu0 %v211
  %1123 = vmatmul.mubr.bf16.gmra.mrb[0].mxu0 %v210
  %v1124 = vpop.f32.mrb[0].mxu0
  %v1125 = vadd.f32 %v355, %v1124
  %v1126 = vpop.f32.mrb[0].mxu0
  %v1127 = vadd.f32 %v359, %v1126
  %v1128 = vpop.f32.mrb[0].mxu0
  %v1129 = vadd.f32 %v355, %v1128
  %v1130 = vpop.f32.mrb[0].mxu0
  %v1131 = vadd.f32 %v359, %v1130
  %1132 = vdwg.mxu0
  %1133 = vmatprep.subr.bf16.mxu0 %v815
  %1134 = vmatpush1.bf16.msra.mxu0 %v814
  %1135 = vmatprep.subr.bf16.mxu0 %v819
  %1136 = vmatpush1.bf16.msra.mxu0 %v818
  %1137 = vmatprep.subr.bf16.mxu0 %v823
  %1138 = vmatpush1.bf16.msra.mxu0 %v822
  %1139 = vmatprep.subr.bf16.mxu0 %v827
  %1140 = vmatpush1.bf16.msra.mxu0 %v826
  %1141 = vmatprep.subr.bf16.mxu0 %v831
  %1142 = vmatpush1.bf16.msra.mxu0 %v830
  %1143 = vmatprep.subr.bf16.mxu0 %v835
  %1144 = vmatpush1.bf16.msra.mxu0 %v834
  %1145 = vmatprep.subr.bf16.mxu0 %v839
  %1146 = vmatpush1.bf16.msra.mxu0 %v838
  %1147 = vmatprep.subr.bf16.mxu0 %v843
  %1148 = vmatpush1.bf16.msra.mxu0 %v842
  %1149 = vmatprep.subr.bf16.mxu0 %v847
  %1150 = vmatpush1.bf16.msra.mxu0 %v846
  %1151 = vmatprep.subr.bf16.mxu0 %v851
  %1152 = vmatpush1.bf16.msra.mxu0 %v850
  %1153 = vmatprep.subr.bf16.mxu0 %v855
  %1154 = vmatpush1.bf16.msra.mxu0 %v854
  %1155 = vmatprep.subr.bf16.mxu0 %v859
  %1156 = vmatpush1.bf16.msra.mxu0 %v858
  %1157 = vmatprep.subr.bf16.mxu0 %v863
  %1158 = vmatpush1.bf16.msra.mxu0 %v862
  %1159 = vmatprep.subr.bf16.mxu0 %v867
  %1160 = vmatpush1.bf16.msra.mxu0 %v866
  %1161 = vmatprep.subr.bf16.mxu0 %v871
  %1162 = vmatpush1.bf16.msra.mxu0 %v870
  %1163 = vmatprep.subr.bf16.mxu0 %v875
  %1164 = vmatpush1.bf16.msra.mxu0 %v874
  %1165 = vmatprep.mubr.bf16.mxu0 %v213
  %1166 = vmatmul.mubr.bf16.gmra.mrb[0].mxu0 %v212
  %v1167 = vpop.f32.mrb[0].mxu0
  %v1168 = vadd.f32 %v1125, %v1167
  %v1169 = vpop.f32.mrb[0].mxu0
  %v1170 = vadd.f32 %v1127, %v1169
  %v1171 = vpop.f32.mrb[0].mxu0
  %v1172 = vadd.f32 %v1129, %v1171
  %v1173 = vpop.f32.mrb[0].mxu0
  %v1174 = vadd.f32 %v1131, %v1173
  %1175 = vdwg.mxu0
  %v1176 = vmax.f32 %v1082, 0.0
  %v1177 = vmax.f32 %v1084, 0.0
  %v1178 = vmax.f32 %v1168, 0.0
  %v1179 = vmax.f32 %v1170, 0.0
  %v1180 = vmax.f32 %v1086, 0.0
  %v1181 = vmax.f32 %v1088, 0.0
  %v1182 = vmax.f32 %v1172, 0.0
  %v1183 = vmax.f32 %v1174, 0.0
  %v1184 = vpack.c.bf16 %v1180, %v1176
  %v1185 = vpack.c.bf16 %v1181, %v1177
  %v1186 = vpack.c.bf16 %v1182, %v1178
  %v1187 = vpack.c.bf16 %v1183, %v1179
  %v1188 = vld [vmem:[%s5] sm:$0xf]
  %v1189 = vld [vmem:[%s5 + $0x4] sm:$0xf]
  %v1190 = vld [vmem:[%s5 + $0x8] sm:$0xf]
  %v1191 = vld [vmem:[%s5 + $0xc] sm:$0xf]
  %v1192 = vld [vmem:[%s5 + $0x10] sm:$0xf]
  %v1193 = vld [vmem:[%s5 + $0x14] sm:$0xf]
  %v1194 = vld [vmem:[%s5 + $0x18] sm:$0xf]
  %v1195 = vld [vmem:[%s5 + $0x1c] sm:$0xf]
  %v1196 = vld [vmem:[%s5 + $0x20] sm:$0xf]
  %v1197 = vld [vmem:[%s5 + $0x24] sm:$0xf]
  %v1198 = vld [vmem:[%s5 + $0x28] sm:$0xf]
  %v1199 = vld [vmem:[%s5 + $0x2c] sm:$0xf]
  %v1200 = vld [vmem:[%s5 + $0x30] sm:$0xf]
  %v1201 = vld [vmem:[%s5 + $0x34] sm:$0xf]
  %v1202 = vld [vmem:[%s5 + $0x38] sm:$0xf]
  %v1203 = vld [vmem:[%s5 + $0x3c] sm:$0xf]
  %v1204 = vld [vmem:[%s5 + $0x40] sm:$0xf]
  %v1205 = vld [vmem:[%s5 + $0x44] sm:$0xf]
  %v1206 = vld [vmem:[%s5 + $0x48] sm:$0xf]
  %v1207 = vld [vmem:[%s5 + $0x4c] sm:$0xf]
  %v1208 = vld [vmem:[%s5 + $0x50] sm:$0xf]
  %v1209 = vld [vmem:[%s5 + $0x54] sm:$0xf]
  %v1210 = vld [vmem:[%s5 + $0x58] sm:$0xf]
  %v1211 = vld [vmem:[%s5 + $0x5c] sm:$0xf]
  %v1212 = vld [vmem:[%s5 + $0x60] sm:$0xf]
  %v1213 = vld [vmem:[%s5 + $0x64] sm:$0xf]
  %v1214 = vld [vmem:[%s5 + $0x68] sm:$0xf]
  %v1215 = vld [vmem:[%s5 + $0x6c] sm:$0xf]
  %v1216 = vld [vmem:[%s5 + $0x70] sm:$0xf]
  %v1217 = vld [vmem:[%s5 + $0x74] sm:$0xf]
  %v1218 = vld [vmem:[%s5 + $0x78] sm:$0xf]
  %v1219 = vld [vmem:[%s5 + $0x7c] sm:$0xf]
  %v1220 = vld [vmem:[%s5 + $0x80] sm:$0xf]
  %v1221 = vld [vmem:[%s5 + $0x84] sm:$0xf]
  %v1222 = vld [vmem:[%s5 + $0x88] sm:$0xf]
  %v1223 = vld [vmem:[%s5 + $0x8c] sm:$0xf]
  %v1224 = vld [vmem:[%s5 + $0x90] sm:$0xf]
  %v1225 = vld [vmem:[%s5 + $0x94] sm:$0xf]
  %v1226 = vld [vmem:[%s5 + $0x98] sm:$0xf]
  %v1227 = vld [vmem:[%s5 + $0x9c] sm:$0xf]
  %v1228 = vld [vmem:[%s5 + $0xa0] sm:$0xf]
  %v1229 = vld [vmem:[%s5 + $0xa4] sm:$0xf]
  %v1230 = vld [vmem:[%s5 + $0xa8] sm:$0xf]
  %v1231 = vld [vmem:[%s5 + $0xac] sm:$0xf]
  %v1232 = vld [vmem:[%s5 + $0xb0] sm:$0xf]
  %v1233 = vld [vmem:[%s5 + $0xb4] sm:$0xf]
  %v1234 = vld [vmem:[%s5 + $0xb8] sm:$0xf]
  %v1235 = vld [vmem:[%s5 + $0xbc] sm:$0xf]
  %v1236 = vld [vmem:[%s5 + $0xc0] sm:$0xf]
  %v1237 = vld [vmem:[%s5 + $0xc4] sm:$0xf]
  %v1238 = vld [vmem:[%s5 + $0xc8] sm:$0xf]
  %v1239 = vld [vmem:[%s5 + $0xcc] sm:$0xf]
  %v1240 = vld [vmem:[%s5 + $0xd0] sm:$0xf]
  %v1241 = vld [vmem:[%s5 + $0xd4] sm:$0xf]
  %v1242 = vld [vmem:[%s5 + $0xd8] sm:$0xf]
  %v1243 = vld [vmem:[%s5 + $0xdc] sm:$0xf]
  %v1244 = vld [vmem:[%s5 + $0xe0] sm:$0xf]
  %v1245 = vld [vmem:[%s5 + $0xe4] sm:$0xf]
  %v1246 = vld [vmem:[%s5 + $0xe8] sm:$0xf]
  %v1247 = vld [vmem:[%s5 + $0xec] sm:$0xf]
  %v1248 = vld [vmem:[%s5 + $0xf0] sm:$0xf]
  %v1249 = vld [vmem:[%s5 + $0xf4] sm:$0xf]
  %v1250 = vld [vmem:[%s5 + $0xf8] sm:$0xf]
  %v1251 = vld [vmem:[%s5 + $0xfc] sm:$0xf]
  %v1252 = vld [vmem:[%s6] sm:$0x1]
  %v1254 = vlaneseq
  %v1255 = vshrl.u32 %v1254, 7
  %v1256 = vsub.s32 0, %v1255
  %v1257 = vrot.slane %v1252, %v1256
  %v1323 = vunpack.c.l.b16 %v1188
  %v1324 = vunpack.c.l.b16 %v1189
  %v1325 = vunpack.c.l.b16 %v1190
  %v1326 = vunpack.c.l.b16 %v1191
  %v1327 = vunpack.c.l.b16 %v1192
  %v1328 = vunpack.c.l.b16 %v1193
  %v1329 = vunpack.c.l.b16 %v1194
  %v1330 = vunpack.c.l.b16 %v1195
  %v1331 = vunpack.c.l.b16 %v1196
  %v1332 = vunpack.c.l.b16 %v1197
  %v1333 = vunpack.c.l.b16 %v1198
  %v1334 = vunpack.c.l.b16 %v1199
  %v1335 = vunpack.c.l.b16 %v1200
  %v1336 = vunpack.c.l.b16 %v1201
  %v1337 = vunpack.c.l.b16 %v1202
  %v1338 = vunpack.c.l.b16 %v1203
  %v1339 = vunpack.c.l.b16 %v1204
  %v1340 = vunpack.c.l.b16 %v1205
  %v1341 = vunpack.c.l.b16 %v1206
  %v1342 = vunpack.c.l.b16 %v1207
  %v1343 = vunpack.c.l.b16 %v1208
  %v1344 = vunpack.c.l.b16 %v1209
  %v1345 = vunpack.c.l.b16 %v1210
  %v1346 = vunpack.c.l.b16 %v1211
  %v1347 = vunpack.c.l.b16 %v1212
  %v1348 = vunpack.c.l.b16 %v1213
  %v1349 = vunpack.c.l.b16 %v1214
  %v1350 = vunpack.c.l.b16 %v1215
  %v1351 = vunpack.c.l.b16 %v1216
  %v1352 = vunpack.c.l.b16 %v1217
  %v1353 = vunpack.c.l.b16 %v1218
  %v1354 = vunpack.c.l.b16 %v1219
  %v1355 = vunpack.c.l.b16 %v1220
  %v1356 = vunpack.c.l.b16 %v1221
  %v1357 = vunpack.c.l.b16 %v1222
  %v1358 = vunpack.c.l.b16 %v1223
  %v1359 = vunpack.c.l.b16 %v1224
  %v1360 = vunpack.c.l.b16 %v1225
  %v1361 = vunpack.c.l.b16 %v1226
  %v1362 = vunpack.c.l.b16 %v1227
  %v1363 = vunpack.c.l.b16 %v1228
  %v1364 = vunpack.c.l.b16 %v1229
  %v1365 = vunpack.c.l.b16 %v1230
  %v1366 = vunpack.c.l.b16 %v1231
  %v1367 = vunpack.c.l.b16 %v1232
  %v1368 = vunpack.c.l.b16 %v1233
  %v1369 = vunpack.c.l.b16 %v1234
  %v1370 = vunpack.c.l.b16 %v1235
  %v1371 = vunpack.c.l.b16 %v1236
  %v1372 = vunpack.c.l.b16 %v1237
  %v1373 = vunpack.c.l.b16 %v1238
  %v1374 = vunpack.c.l.b16 %v1239
  %v1375 = vunpack.c.l.b16 %v1240
  %v1376 = vunpack.c.l.b16 %v1241
  %v1377 = vunpack.c.l.b16 %v1242
  %v1378 = vunpack.c.l.b16 %v1243
  %v1379 = vunpack.c.l.b16 %v1244
  %v1380 = vunpack.c.l.b16 %v1245
  %v1381 = vunpack.c.l.b16 %v1246
  %v1382 = vunpack.c.l.b16 %v1247
  %v1383 = vunpack.c.l.b16 %v1248
  %v1384 = vunpack.c.l.b16 %v1249
  %v1385 = vunpack.c.l.b16 %v1250
  %v1386 = vunpack.c.l.b16 %v1251
  %v1387 = vpack.c.b16 %v1324, %v1323
  %v1388 = vpack.c.b16 %v1326, %v1325
  %v1389 = vpack.c.b16 %v1328, %v1327
  %v1390 = vpack.c.b16 %v1330, %v1329
  %v1391 = vpack.c.b16 %v1332, %v1331
  %v1392 = vpack.c.b16 %v1334, %v1333
  %v1393 = vpack.c.b16 %v1336, %v1335
  %v1394 = vpack.c.b16 %v1338, %v1337
  %v1395 = vpack.c.b16 %v1340, %v1339
  %v1396 = vpack.c.b16 %v1342, %v1341
  %v1397 = vpack.c.b16 %v1344, %v1343
  %v1398 = vpack.c.b16 %v1346, %v1345
  %v1399 = vpack.c.b16 %v1348, %v1347
  %v1400 = vpack.c.b16 %v1350, %v1349
  %v1401 = vpack.c.b16 %v1352, %v1351
  %v1402 = vpack.c.b16 %v1354, %v1353
  %v1403 = vpack.c.b16 %v1356, %v1355
  %v1404 = vpack.c.b16 %v1358, %v1357
  %v1405 = vpack.c.b16 %v1360, %v1359
  %v1406 = vpack.c.b16 %v1362, %v1361
  %v1407 = vpack.c.b16 %v1364, %v1363
  %v1408 = vpack.c.b16 %v1366, %v1365
  %v1409 = vpack.c.b16 %v1368, %v1367
  %v1410 = vpack.c.b16 %v1370, %v1369
  %v1411 = vpack.c.b16 %v1372, %v1371
  %v1412 = vpack.c.b16 %v1374, %v1373
  %v1413 = vpack.c.b16 %v1376, %v1375
  %v1414 = vpack.c.b16 %v1378, %v1377
  %v1415 = vpack.c.b16 %v1380, %v1379
  %v1416 = vpack.c.b16 %v1382, %v1381
  %v1417 = vpack.c.b16 %v1384, %v1383
  %v1418 = vpack.c.b16 %v1386, %v1385
  %1451 = vmatprep.subr.bf16.mxu0 0
  %1452 = vmatpush1.bf16.msra.mxu0 %v1387
  %1453 = vmatprep.subr.bf16.mxu0 0
  %1454 = vmatpush1.bf16.msra.mxu0 %v1388
  %1455 = vmatprep.subr.bf16.mxu0 0
  %1456 = vmatpush1.bf16.msra.mxu0 %v1389
  %1457 = vmatprep.subr.bf16.mxu0 0
  %1458 = vmatpush1.bf16.msra.mxu0 %v1390
  %1459 = vmatprep.subr.bf16.mxu0 0
  %1460 = vmatpush1.bf16.msra.mxu0 %v1391
  %1461 = vmatprep.subr.bf16.mxu0 0
  %1462 = vmatpush1.bf16.msra.mxu0 %v1392
  %1463 = vmatprep.subr.bf16.mxu0 0
  %1464 = vmatpush1.bf16.msra.mxu0 %v1393
  %1465 = vmatprep.subr.bf16.mxu0 0
  %1466 = vmatpush1.bf16.msra.mxu0 %v1394
  %1467 = vmatprep.subr.bf16.mxu0 0
  %1468 = vmatpush1.bf16.msra.mxu0 %v1395
  %1469 = vmatprep.subr.bf16.mxu0 0
  %1470 = vmatpush1.bf16.msra.mxu0 %v1396
  %1471 = vmatprep.subr.bf16.mxu0 0
  %1472 = vmatpush1.bf16.msra.mxu0 %v1397
  %1473 = vmatprep.subr.bf16.mxu0 0
  %1474 = vmatpush1.bf16.msra.mxu0 %v1398
  %1475 = vmatprep.subr.bf16.mxu0 0
  %1476 = vmatpush1.bf16.msra.mxu0 %v1399
  %1477 = vmatprep.subr.bf16.mxu0 0
  %1478 = vmatpush1.bf16.msra.mxu0 %v1400
  %1479 = vmatprep.subr.bf16.mxu0 0
  %1480 = vmatpush1.bf16.msra.mxu0 %v1401
  %1481 = vmatprep.subr.bf16.mxu0 0
  %1482 = vmatpush1.bf16.msra.mxu0 %v1402
  %1483 = vmatprep.mubr.bf16.mxu0 %v1185
  %1484 = vmatmul.mubr.bf16.gmra.mrb[0].mxu0 %v1184
  %v1485 = vpop.f32.mrb[0].mxu0
  %v1486 = vadd.f32 %v1257, %v1485
  %v1487 = vpop.f32.mrb[0].mxu0
  %v1488 = vpop.f32.mrb[0].mxu0
  %v1489 = vadd.f32 %v1257, %v1488
  %v1490 = vpop.f32.mrb[0].mxu0
  %1491 = vdwg.mxu0
  %1492 = vmatprep.subr.bf16.mxu0 0
  %1493 = vmatpush1.bf16.msra.mxu0 %v1403
  %1494 = vmatprep.subr.bf16.mxu0 0
  %1495 = vmatpush1.bf16.msra.mxu0 %v1404
  %1496 = vmatprep.subr.bf16.mxu0 0
  %1497 = vmatpush1.bf16.msra.mxu0 %v1405
  %1498 = vmatprep.subr.bf16.mxu0 0
  %1499 = vmatpush1.bf16.msra.mxu0 %v1406
  %1500 = vmatprep.subr.bf16.mxu0 0
  %1501 = vmatpush1.bf16.msra.mxu0 %v1407
  %1502 = vmatprep.subr.bf16.mxu0 0
  %1503 = vmatpush1.bf16.msra.mxu0 %v1408
  %1504 = vmatprep.subr.bf16.mxu0 0
  %1505 = vmatpush1.bf16.msra.mxu0 %v1409
  %1506 = vmatprep.subr.bf16.mxu0 0
  %1507 = vmatpush1.bf16.msra.mxu0 %v1410
  %1508 = vmatprep.subr.bf16.mxu0 0
  %1509 = vmatpush1.bf16.msra.mxu0 %v1411
  %1510 = vmatprep.subr.bf16.mxu0 0
  %1511 = vmatpush1.bf16.msra.mxu0 %v1412
  %1512 = vmatprep.subr.bf16.mxu0 0
  %1513 = vmatpush1.bf16.msra.mxu0 %v1413
  %1514 = vmatprep.subr.bf16.mxu0 0
  %1515 = vmatpush1.bf16.msra.mxu0 %v1414
  %1516 = vmatprep.subr.bf16.mxu0 0
  %1517 = vmatpush1.bf16.msra.mxu0 %v1415
  %1518 = vmatprep.subr.bf16.mxu0 0
  %1519 = vmatpush1.bf16.msra.mxu0 %v1416
  %1520 = vmatprep.subr.bf16.mxu0 0
  %1521 = vmatpush1.bf16.msra.mxu0 %v1417
  %1522 = vmatprep.subr.bf16.mxu0 0
  %1523 = vmatpush1.bf16.msra.mxu0 %v1418
  %1524 = vmatprep.mubr.bf16.mxu0 %v1187
  %1525 = vmatmul.mubr.bf16.gmra.mrb[0].mxu0 %v1186
  %v1526 = vpop.f32.mrb[0].mxu0
  %v1527 = vadd.f32 %v1486, %v1526
  %v1528 = vpop.f32.mrb[0].mxu0
  %v1529 = vpop.f32.mrb[0].mxu0
  %v1530 = vadd.f32 %v1489, %v1529
  %v1531 = vpop.f32.mrb[0].mxu0
  %1532 = vdwg.mxu0
  %v1533 = vpack.c.bf16 %v1530, %v1527
  %v1534 = vld [vmem:[%s7] sm:$0xf]
  %v1535 = vld [vmem:[%s7 + $0x4] sm:$0xf]
  %v1536 = vld [vmem:[%s7 + $0x8] sm:$0xf]
  %v1537 = vld [vmem:[%s7 + $0xc] sm:$0xf]
  %v1538 = vld [vmem:[%s7 + $0x10] sm:$0xf]
  %v1539 = vld [vmem:[%s7 + $0x14] sm:$0xf]
  %v1540 = vld [vmem:[%s7 + $0x18] sm:$0xf]
  %v1541 = vld [vmem:[%s7 + $0x1c] sm:$0xf]
  %v1542 = vld [vmem:[%s7 + $0x20] sm:$0xf]
  %v1543 = vld [vmem:[%s7 + $0x24] sm:$0xf]
  %v1544 = vld [vmem:[%s7 + $0x28] sm:$0xf]
  %v1545 = vld [vmem:[%s7 + $0x2c] sm:$0xf]
  %v1546 = vld [vmem:[%s7 + $0x30] sm:$0xf]
  %v1547 = vld [vmem:[%s7 + $0x34] sm:$0xf]
  %v1548 = vld [vmem:[%s7 + $0x38] sm:$0xf]
  %v1549 = vld [vmem:[%s7 + $0x3c] sm:$0xf]
  %v1550 = vld [vmem:[%s8] sm:$0x1]
  %v1552 = vlaneseq
  %v1553 = vshrl.u32 %v1552, 7
  %v1554 = vsub.s32 0, %v1553
  %v1555 = vrot.slane %v1550, %v1554
  %v1573 = vunpack.c.l.b16 %v1534
  %v1574 = vunpack.c.l.b16 %v1535
  %v1575 = vunpack.c.l.b16 %v1536
  %v1576 = vunpack.c.l.b16 %v1537
  %v1577 = vunpack.c.l.b16 %v1538
  %v1578 = vunpack.c.l.b16 %v1539
  %v1579 = vunpack.c.l.b16 %v1540
  %v1580 = vunpack.c.l.b16 %v1541
  %v1581 = vunpack.c.l.b16 %v1542
  %v1582 = vunpack.c.l.b16 %v1543
  %v1583 = vunpack.c.l.b16 %v1544
  %v1584 = vunpack.c.l.b16 %v1545
  %v1585 = vunpack.c.l.b16 %v1546
  %v1586 = vunpack.c.l.b16 %v1547
  %v1587 = vunpack.c.l.b16 %v1548
  %v1588 = vunpack.c.l.b16 %v1549
  %v1589 = vpack.c.b16 %v1574, %v1573
  %v1590 = vpack.c.b16 %v1576, %v1575
  %v1591 = vpack.c.b16 %v1578, %v1577
  %v1592 = vpack.c.b16 %v1580, %v1579
  %v1593 = vpack.c.b16 %v1582, %v1581
  %v1594 = vpack.c.b16 %v1584, %v1583
  %v1595 = vpack.c.b16 %v1586, %v1585
  %v1596 = vpack.c.b16 %v1588, %v1587
  %1605 = vmatprep.subr.bf16.mxu0 0
  %1606 = vmatpush1.bf16.msra.mxu0 %v1589
  %1607 = vmatprep.subr.bf16.mxu0 0
  %1608 = vmatpush1.bf16.msra.mxu0 %v1590
  %1609 = vmatprep.subr.bf16.mxu0 0
  %1610 = vmatpush1.bf16.msra.mxu0 %v1591
  %1611 = vmatprep.subr.bf16.mxu0 0
  %1612 = vmatpush1.bf16.msra.mxu0 %v1592
  %1613 = vmatprep.subr.bf16.mxu0 0
  %1614 = vmatpush1.bf16.msra.mxu0 %v1593
  %1615 = vmatprep.subr.bf16.mxu0 0
  %1616 = vmatpush1.bf16.msra.mxu0 %v1594
  %1617 = vmatprep.subr.bf16.mxu0 0
  %1618 = vmatpush1.bf16.msra.mxu0 %v1595
  %1619 = vmatprep.subr.bf16.mxu0 0
  %1620 = vmatpush1.bf16.msra.mxu0 %v1596
  %1621 = vmatprep.subr.bf16.mxu0 0
  %1622 = vmatpush1.bf16.msra.mxu0 0
  %1623 = vmatprep.subr.bf16.mxu0 0
  %1624 = vmatpush1.bf16.msra.mxu0 0
  %1625 = vmatprep.subr.bf16.mxu0 0
  %1626 = vmatpush1.bf16.msra.mxu0 0
  %1627 = vmatprep.subr.bf16.mxu0 0
  %1628 = vmatpush1.bf16.msra.mxu0 0
  %1629 = vmatprep.subr.bf16.mxu0 0
  %1630 = vmatpush1.bf16.msra.mxu0 0
  %1631 = vmatprep.subr.bf16.mxu0 0
  %1632 = vmatpush1.bf16.msra.mxu0 0
  %1633 = vmatprep.subr.bf16.mxu0 0
  %1634 = vmatpush1.bf16.msra.mxu0 0
  %1635 = vmatprep.subr.bf16.mxu0 0
  %1636 = vmatpush1.bf16.msra.mxu0 0
  %1637 = vmatprep.mubr.bf16.mxu0 0
  %1638 = vmatmul.mubr.bf16.gmra.mrb[0].mxu0 %v1533
  %v1639 = vpop.f32.mrb[0].mxu0
  %v1640 = vadd.f32 %v1555, %v1639
  %v1641 = vpop.f32.mrb[0].mxu0
  %v1642 = vpop.f32.mrb[0].mxu0
  %v1643 = vadd.f32 %v1555, %v1642
  %v1644 = vpop.f32.mrb[0].mxu0
  %1645 = vdwg.mxu0
  %1646 = vst [vmem:[%s9] sm:$0xff] %v1527
  %1647 = vst [vmem:[%s9 + $0x8] sm:$0xff] %v1530
  %1648 = vst [vmem:[%s10] sm:$0xff] %v1640
  %1649 = vst [vmem:[%s10 + $0x8] sm:$0xff] %v1643
  // Predicated region
  $region38: #{textnet_forward.1} parent=0 // pred_check
    _
  $region39: #{textnet_forward.1} parent=0 // pred_check_branch
    %1651 = sbr.rel (0) target = $region41
  $region40: #{textnet_forward.1} parent=0 // pred_region
    _
  $region41: #{textnet_forward.1} parent=0 // pred_fallthru
    _
  // Predicated region
  $region42: #{textnet_forward.1} parent=0 // pred_check
    _
  $region43: #{textnet_forward.1} parent=0 // pred_check_branch
    %1653 = sbr.rel (0) target = $region45
  $region44: #{textnet_forward.1} parent=0 // pred_region
    _
  $region45: #{textnet_forward.1} parent=0 // pred_fallthru
    _
  // Predicated region
  $region46: #{textnet_forward.1} parent=0 // pred_check
    _
  $region47: #{textnet_forward.1} parent=0 // pred_check_branch
    %1655 = sbr.rel (0) target = $region49
  $region48: #{textnet_forward.1} parent=0 // pred_region
    _
  $region49: #{textnet_forward.1} parent=0 // pred_fallthru
    _
  // Predicated region
  $region50: #{textnet_forward.1} parent=0 // pred_check
    _
  $region51: #{textnet_forward.1} parent=0 // pred_check_branch
    %1657 = sbr.rel (0) target = $region53
  $region52: #{textnet_forward.1} parent=0 // pred_region
    _
  $region53: #{textnet_forward.1} parent=0 // pred_fallthru
    _

</llo_original>
